<compile_context>
chip_gen: v5e
topology: v5e:2x2
jax: 0.10.0
libtpu: 0.0.40
codegen_flags: <defaults>
</compile_context>

<pallas_src>
import jax
import jax.numpy as jnp
from jax import lax
from jax.experimental import pallas as pl
from jax.experimental.pallas import tpu as pltpu

# Small, MXU-friendly example configuration (matches the module's __init__).
D_MODEL = 32
NUM_HEADS = 4
DEPTH = D_MODEL // NUM_HEADS
BATCH = 2
SEQ = 8


def mha_kernel(q_ref, k_ref, v_ref,
               wq_ref, wk_ref, wv_ref,
               bq_ref, bk_ref, bv_ref,
               wo_ref, bo_ref, o_ref):
    """One grid step == one batch element.

       q_ref/k_ref/v_ref : (1, S, D)   activations for this batch element
       wq_ref/wk_ref/wv_ref : (H, D, DEPTH) per-head weights, pre-transposed
                              to (in, out); Q slab carries the 1/sqrt(depth)
                              score scale (folded on the host, once)
       bq_ref/bk_ref/bv_ref : (H, 1, DEPTH)
       wo_ref : (H, DEPTH, D) per-head rows of the pre-transposed output weight
       bo_ref : (1, D)
       o_ref  : (1, S, D)
    """
    q = q_ref[0]            # (S, D)
    k = k_ref[0]
    v = v_ref[0]

    acc = jnp.zeros((q.shape[0], D_MODEL), jnp.float32)
    for h in range(NUM_HEADS):                         # static unroll over heads
        # Per-head projections: clean (S,D) x (D,DEPTH) MXU operands, no
        # lane-offset slicing of a fused activation.
        Qh = jnp.dot(q, wq_ref[h], preferred_element_type=jnp.float32) + bq_ref[h]
        Kh = jnp.dot(k, wk_ref[h], preferred_element_type=jnp.float32) + bk_ref[h]
        Vh = jnp.dot(v, wv_ref[h], preferred_element_type=jnp.float32) + bv_ref[h]

        # Qh @ Kh^T via dot_general (contract dim 1 of both) — no transpose.
        scores = lax.dot_general(Qh, Kh, (((1,), (1,)), ((), ())),
                                 preferred_element_type=jnp.float32)   # (S, S)

        m = jnp.max(scores, axis=-1, keepdims=True)
        p = jnp.exp(scores - m)
        w = p / jnp.sum(p, axis=-1, keepdims=True)      # exact softmax (tight tol)

        head = jnp.dot(w, Vh, preferred_element_type=jnp.float32)      # (S, DEPTH)
        # Fused output projection: accumulate head_h @ WoT-rows-of-head-h
        # instead of concatenating heads along lanes.
        acc = acc + jnp.dot(head, wo_ref[h], preferred_element_type=jnp.float32)

    # TODO(synk): optional user-supplied attention mask (mask==0 -> -1e9) not
    # wired in; this kernel covers the mask=None forward path only.
    o_ref[0] = (acc + bo_ref[...]).astype(o_ref.dtype)


def prepare_mha_params(params):
    """One-time (init-time) parameter transform: pre-transpose weights to
    (in, out) layout, split per head on a leading axis, and fold the
    1/sqrt(depth) score scale into the Q projection."""
    D, H, dep = D_MODEL, NUM_HEADS, DEPTH
    scale = 1.0 / jnp.sqrt(jnp.float32(dep))

    def per_head(w_t):              # (in=D, out=D) -> (H, D, dep)
        return w_t.reshape(D, H, dep).transpose(1, 0, 2)

    def bias_per_head(b):           # (1, D) -> (H, 1, dep)
        return b.reshape(1, H, dep).transpose(1, 0, 2)

    return {
        "wq_h": per_head(params["wq"].T) * scale,
        "wk_h": per_head(params["wk"].T),
        "wv_h": per_head(params["wv"].T),
        "bq_h": bias_per_head(params["bq"]) * scale,
        "bk_h": bias_per_head(params["bk"]),
        "bv_h": bias_per_head(params["bv"]),
        "wo_h": params["wo"].T.reshape(H, dep, D),      # (H, dep, D)
        "bo": params["bo"],                             # (1, D)
    }


def multi_head_attention(query, key, value, prepped):
    B, S, D = query.shape
    assert D == D_MODEL
    H, dep = NUM_HEADS, DEPTH

    act_spec = pl.BlockSpec((1, S, D), lambda b: (b, 0, 0))
    w_spec = pl.BlockSpec((H, D, dep), lambda b: (0, 0, 0))
    b_spec = pl.BlockSpec((H, 1, dep), lambda b: (0, 0, 0))
    wo_spec = pl.BlockSpec((H, dep, D), lambda b: (0, 0, 0))
    bo_spec = pl.BlockSpec((1, D), lambda b: (0, 0))

    return pl.pallas_call(
        mha_kernel,
        out_shape=jax.ShapeDtypeStruct((B, S, D), query.dtype),
        grid=(B,),
        in_specs=[act_spec, act_spec, act_spec,
                  w_spec, w_spec, w_spec,
                  b_spec, b_spec, b_spec,
                  wo_spec, bo_spec],
        out_specs=act_spec,
        compiler_params=pltpu.CompilerParams(
            dimension_semantics=("parallel",)),
    )(query, key, value,
      prepped["wq_h"], prepped["wk_h"], prepped["wv_h"],
      prepped["bq_h"], prepped["bk_h"], prepped["bv_h"],
      prepped["wo_h"], prepped["bo"])


mha_jit = jax.jit(multi_head_attention)


def _reference(query, key, value, params):
    """Pure-JAX reference mirroring the PyTorch forward exactly."""
    B, S, D = query.shape

    def lin(x, w, b):
        return x @ w.T + b[0]

    Q = lin(query, params["wq"], params["bq"])
    K = lin(key, params["wk"], params["bk"])
    V = lin(value, params["wv"], params["bv"])

    def split(x):
        return x.reshape(B, S, NUM_HEADS, DEPTH).transpose(0, 2, 1, 3)

    Q, K, V = split(Q), split(K), split(V)
    scores = jnp.einsum("bhqd,bhkd->bhqk", Q, K) / jnp.sqrt(jnp.float32(DEPTH))
    w = jax.nn.softmax(scores, axis=-1)
    out = jnp.einsum("bhqk,bhkd->bhqd", w, V)
    out = out.transpose(0, 2, 1, 3).reshape(B, S, D)
    return lin(out, params["wo"], params["bo"])


def init_params(key):
    ks = jax.random.split(key, 8)
    bound = 1.0 / jnp.sqrt(jnp.float32(D_MODEL))

    def u(k, shape):
        return jax.random.uniform(k, shape, jnp.float32, -bound, bound)

    return {
        "wq": u(ks[0], (D_MODEL, D_MODEL)), "bq": u(ks[1], (1, D_MODEL)),
        "wk": u(ks[2], (D_MODEL, D_MODEL)), "bk": u(ks[3], (1, D_MODEL)),
        "wv": u(ks[4], (D_MODEL, D_MODEL)), "bv": u(ks[5], (1, D_MODEL)),
        "wo": u(ks[6], (D_MODEL, D_MODEL)), "bo": u(ks[7], (1, D_MODEL)),
    }


if __name__ == "__main__":
    root = jax.random.PRNGKey(0)
    kp, kq, kk, kv = jax.random.split(root, 4)
    params = init_params(kp)
    prepped = prepare_mha_params(params)     # one-time, not per forward call
    prepped = jax.tree_util.tree_map(jax.block_until_ready, prepped)

    query = jax.random.normal(kq, (BATCH, SEQ, D_MODEL), jnp.float32)
    key_ = jax.random.normal(kk, (BATCH, SEQ, D_MODEL), jnp.float32)
    value = jax.random.normal(kv, (BATCH, SEQ, D_MODEL), jnp.float32)

    out = mha_jit(query, key_, value, prepped)
    out = jax.block_until_ready(out)

    ref = _reference(query, key_, value, params)
    assert out.shape == (BATCH, SEQ, D_MODEL)
    assert jnp.allclose(out, ref, atol=1e-4, rtol=1e-4), "mismatch vs reference"

    print("KERNEL_OK")
</pallas_src>

<mosaic_0001>
module attributes {stable_mosaic.version = 11 : i64} {
  func.func @mha_kernel(%arg0: i32, %arg1: memref<1x8x32xf32, #tpu.memory_space<vmem>>, %arg2: memref<1x8x32xf32, #tpu.memory_space<vmem>>, %arg3: memref<1x8x32xf32, #tpu.memory_space<vmem>>, %arg4: memref<4x32x8xf32, #tpu.memory_space<vmem>>, %arg5: memref<4x32x8xf32, #tpu.memory_space<vmem>>, %arg6: memref<4x32x8xf32, #tpu.memory_space<vmem>>, %arg7: memref<4x1x8xf32, #tpu.memory_space<vmem>>, %arg8: memref<4x1x8xf32, #tpu.memory_space<vmem>>, %arg9: memref<4x1x8xf32, #tpu.memory_space<vmem>>, %arg10: memref<4x8x32xf32, #tpu.memory_space<vmem>>, %arg11: memref<1x32xf32, #tpu.memory_space<vmem>>, %arg12: memref<1x8x32xf32, #tpu.memory_space<vmem>>) attributes {dimension_semantics = [#tpu.dimension_semantics<parallel>], iteration_bounds = array<i64: 2>, scalar_prefetch = 0 : i64, scratch_operands = 0 : i64, tpu.core_type = #tpu.core_type<tc>, window_params = [{transform_indices = @transform_0, window_bounds = array<i64: 1, 8, 32>}, {transform_indices = @transform_1, window_bounds = array<i64: 1, 8, 32>}, {transform_indices = @transform_2, window_bounds = array<i64: 1, 8, 32>}, {pipeline_mode = #tpu.pipeline_mode<synchronous>, transform_indices = @transform_3, window_bounds = array<i64: 4, 32, 8>}, {pipeline_mode = #tpu.pipeline_mode<synchronous>, transform_indices = @transform_4, window_bounds = array<i64: 4, 32, 8>}, {pipeline_mode = #tpu.pipeline_mode<synchronous>, transform_indices = @transform_5, window_bounds = array<i64: 4, 32, 8>}, {pipeline_mode = #tpu.pipeline_mode<synchronous>, transform_indices = @transform_6, window_bounds = array<i64: 4, 1, 8>}, {pipeline_mode = #tpu.pipeline_mode<synchronous>, transform_indices = @transform_7, window_bounds = array<i64: 4, 1, 8>}, {pipeline_mode = #tpu.pipeline_mode<synchronous>, transform_indices = @transform_8, window_bounds = array<i64: 4, 1, 8>}, {pipeline_mode = #tpu.pipeline_mode<synchronous>, transform_indices = @transform_9, window_bounds = array<i64: 4, 8, 32>}, {pipeline_mode = #tpu.pipeline_mode<synchronous>, transform_indices = @transform_10, window_bounds = array<i64: 1, 32>}, {transform_indices = @transform_11, window_bounds = array<i64: 1, 8, 32>}]} {
    %c0 = arith.constant 0 : index
    %c0_0 = arith.constant 0 : index
    %c0_1 = arith.constant 0 : index
    %0 = vector.load %arg1[%c0, %c0_0, %c0_1] : memref<1x8x32xf32, #tpu.memory_space<vmem>>, vector<1x8x32xf32>
    %1 = vector.shape_cast %0 : vector<1x8x32xf32> to vector<8x32xf32>
    %c0_2 = arith.constant 0 : index
    %c0_3 = arith.constant 0 : index
    %c0_4 = arith.constant 0 : index
    %2 = vector.load %arg2[%c0_2, %c0_3, %c0_4] : memref<1x8x32xf32, #tpu.memory_space<vmem>>, vector<1x8x32xf32>
    %3 = vector.shape_cast %2 : vector<1x8x32xf32> to vector<8x32xf32>
    %c0_5 = arith.constant 0 : index
    %c0_6 = arith.constant 0 : index
    %c0_7 = arith.constant 0 : index
    %4 = vector.load %arg3[%c0_5, %c0_6, %c0_7] : memref<1x8x32xf32, #tpu.memory_space<vmem>>, vector<1x8x32xf32>
    %5 = vector.shape_cast %4 : vector<1x8x32xf32> to vector<8x32xf32>
    %cst = arith.constant 0.000000e+00 : f32
    %6 = vector.broadcast %cst : f32 to vector<8x32xf32>
    %c0_8 = arith.constant 0 : index
    %c0_9 = arith.constant 0 : index
    %c0_10 = arith.constant 0 : index
    %7 = vector.load %arg4[%c0_8, %c0_9, %c0_10] : memref<4x32x8xf32, #tpu.memory_space<vmem>>, vector<1x32x8xf32>
    %8 = vector.shape_cast %7 : vector<1x32x8xf32> to vector<32x8xf32>
    %cst_11 = arith.constant dense<0.000000e+00> : vector<8x8xf32>
    %9 = tpu.matmul %1, %8, %cst_11 {dimension_numbers = #tpu.dot_dimension_numbers<[1], [0], [0], [1], [0, 0, 1, 1], [], []>} : vector<8x32xf32>, vector<32x8xf32>, vector<8x8xf32> -> vector<8x8xf32>
    %c0_12 = arith.constant 0 : index
    %c0_13 = arith.constant 0 : index
    %c0_14 = arith.constant 0 : index
    %10 = vector.load %arg7[%c0_12, %c0_13, %c0_14] : memref<4x1x8xf32, #tpu.memory_space<vmem>>, vector<1x1x8xf32>
    %11 = vector.shape_cast %10 : vector<1x1x8xf32> to vector<1x8xf32>
    %12 = vector.broadcast %11 : vector<1x8xf32> to vector<8x8xf32>
    %13 = arith.addf %9, %12 : vector<8x8xf32>
    %c0_15 = arith.constant 0 : index
    %c0_16 = arith.constant 0 : index
    %c0_17 = arith.constant 0 : index
    %14 = vector.load %arg5[%c0_15, %c0_16, %c0_17] : memref<4x32x8xf32, #tpu.memory_space<vmem>>, vector<1x32x8xf32>
    %15 = vector.shape_cast %14 : vector<1x32x8xf32> to vector<32x8xf32>
    %cst_18 = arith.constant dense<0.000000e+00> : vector<8x8xf32>
    %16 = tpu.matmul %3, %15, %cst_18 {dimension_numbers = #tpu.dot_dimension_numbers<[1], [0], [0], [1], [0, 0, 1, 1], [], []>} : vector<8x32xf32>, vector<32x8xf32>, vector<8x8xf32> -> vector<8x8xf32>
    %c0_19 = arith.constant 0 : index
    %c0_20 = arith.constant 0 : index
    %c0_21 = arith.constant 0 : index
    %17 = vector.load %arg8[%c0_19, %c0_20, %c0_21] : memref<4x1x8xf32, #tpu.memory_space<vmem>>, vector<1x1x8xf32>
    %18 = vector.shape_cast %17 : vector<1x1x8xf32> to vector<1x8xf32>
    %19 = vector.broadcast %18 : vector<1x8xf32> to vector<8x8xf32>
    %20 = arith.addf %16, %19 : vector<8x8xf32>
    %c0_22 = arith.constant 0 : index
    %c0_23 = arith.constant 0 : index
    %c0_24 = arith.constant 0 : index
    %21 = vector.load %arg6[%c0_22, %c0_23, %c0_24] : memref<4x32x8xf32, #tpu.memory_space<vmem>>, vector<1x32x8xf32>
    %22 = vector.shape_cast %21 : vector<1x32x8xf32> to vector<32x8xf32>
    %cst_25 = arith.constant dense<0.000000e+00> : vector<8x8xf32>
    %23 = tpu.matmul %5, %22, %cst_25 {dimension_numbers = #tpu.dot_dimension_numbers<[1], [0], [0], [1], [0, 0, 1, 1], [], []>} : vector<8x32xf32>, vector<32x8xf32>, vector<8x8xf32> -> vector<8x8xf32>
    %c0_26 = arith.constant 0 : index
    %c0_27 = arith.constant 0 : index
    %c0_28 = arith.constant 0 : index
    %24 = vector.load %arg9[%c0_26, %c0_27, %c0_28] : memref<4x1x8xf32, #tpu.memory_space<vmem>>, vector<1x1x8xf32>
    %25 = vector.shape_cast %24 : vector<1x1x8xf32> to vector<1x8xf32>
    %26 = vector.broadcast %25 : vector<1x8xf32> to vector<8x8xf32>
    %27 = arith.addf %23, %26 : vector<8x8xf32>
    %cst_29 = arith.constant dense<0.000000e+00> : vector<8x8xf32>
    %28 = tpu.matmul %13, %20, %cst_29 {dimension_numbers = #tpu.dot_dimension_numbers<[1], [1], [0], [0], [0, 0, 1, 0], [], []>} : vector<8x8xf32>, vector<8x8xf32>, vector<8x8xf32> -> vector<8x8xf32>
    %cst_30 = arith.constant dense<0xFF800000> : vector<8xf32>
    %29 = vector.multi_reduction <maximumf>, %28, %cst_30 [1] : vector<8x8xf32> to vector<8xf32>
    %30 = vector.shape_cast %29 : vector<8xf32> to vector<8x1xf32>
    %31 = vector.broadcast %30 : vector<8x1xf32> to vector<8x8xf32>
    %32 = arith.subf %28, %31 : vector<8x8xf32>
    %33 = math.exp %32 : vector<8x8xf32>
    %cst_31 = arith.constant dense<0.000000e+00> : vector<8xf32>
    %34 = vector.multi_reduction <add>, %33, %cst_31 [1] : vector<8x8xf32> to vector<8xf32>
    %35 = vector.shape_cast %34 : vector<8xf32> to vector<8x1xf32>
    %36 = vector.broadcast %35 : vector<8x1xf32> to vector<8x8xf32>
    %37 = arith.divf %33, %36 : vector<8x8xf32>
    %cst_32 = arith.constant dense<0.000000e+00> : vector<8x8xf32>
    %38 = tpu.matmul %37, %27, %cst_32 {dimension_numbers = #tpu.dot_dimension_numbers<[1], [0], [0], [1], [0, 0, 1, 1], [], []>} : vector<8x8xf32>, vector<8x8xf32>, vector<8x8xf32> -> vector<8x8xf32>
    %c0_33 = arith.constant 0 : index
    %c0_34 = arith.constant 0 : index
    %c0_35 = arith.constant 0 : index
    %39 = vector.load %arg10[%c0_33, %c0_34, %c0_35] : memref<4x8x32xf32, #tpu.memory_space<vmem>>, vector<1x8x32xf32>
    %40 = vector.shape_cast %39 : vector<1x8x32xf32> to vector<8x32xf32>
    %cst_36 = arith.constant dense<0.000000e+00> : vector<8x32xf32>
    %41 = tpu.matmul %38, %40, %cst_36 {dimension_numbers = #tpu.dot_dimension_numbers<[1], [0], [0], [1], [0, 0, 1, 1], [], []>} : vector<8x8xf32>, vector<8x32xf32>, vector<8x32xf32> -> vector<8x32xf32>
    %42 = arith.addf %6, %41 : vector<8x32xf32>
    %c1 = arith.constant 1 : index
    %c0_37 = arith.constant 0 : index
    %c0_38 = arith.constant 0 : index
    %43 = vector.load %arg4[%c1, %c0_37, %c0_38] : memref<4x32x8xf32, #tpu.memory_space<vmem>>, vector<1x32x8xf32>
    %44 = vector.shape_cast %43 : vector<1x32x8xf32> to vector<32x8xf32>
    %cst_39 = arith.constant dense<0.000000e+00> : vector<8x8xf32>
    %45 = tpu.matmul %1, %44, %cst_39 {dimension_numbers = #tpu.dot_dimension_numbers<[1], [0], [0], [1], [0, 0, 1, 1], [], []>} : vector<8x32xf32>, vector<32x8xf32>, vector<8x8xf32> -> vector<8x8xf32>
    %c1_40 = arith.constant 1 : index
    %c0_41 = arith.constant 0 : index
    %c0_42 = arith.constant 0 : index
    %46 = vector.load %arg7[%c1_40, %c0_41, %c0_42] : memref<4x1x8xf32, #tpu.memory_space<vmem>>, vector<1x1x8xf32>
    %47 = vector.shape_cast %46 : vector<1x1x8xf32> to vector<1x8xf32>
    %48 = vector.broadcast %47 : vector<1x8xf32> to vector<8x8xf32>
    %49 = arith.addf %45, %48 : vector<8x8xf32>
    %c1_43 = arith.constant 1 : index
    %c0_44 = arith.constant 0 : index
    %c0_45 = arith.constant 0 : index
    %50 = vector.load %arg5[%c1_43, %c0_44, %c0_45] : memref<4x32x8xf32, #tpu.memory_space<vmem>>, vector<1x32x8xf32>
    %51 = vector.shape_cast %50 : vector<1x32x8xf32> to vector<32x8xf32>
    %cst_46 = arith.constant dense<0.000000e+00> : vector<8x8xf32>
    %52 = tpu.matmul %3, %51, %cst_46 {dimension_numbers = #tpu.dot_dimension_numbers<[1], [0], [0], [1], [0, 0, 1, 1], [], []>} : vector<8x32xf32>, vector<32x8xf32>, vector<8x8xf32> -> vector<8x8xf32>
    %c1_47 = arith.constant 1 : index
    %c0_48 = arith.constant 0 : index
    %c0_49 = arith.constant 0 : index
    %53 = vector.load %arg8[%c1_47, %c0_48, %c0_49] : memref<4x1x8xf32, #tpu.memory_space<vmem>>, vector<1x1x8xf32>
    %54 = vector.shape_cast %53 : vector<1x1x8xf32> to vector<1x8xf32>
    %55 = vector.broadcast %54 : vector<1x8xf32> to vector<8x8xf32>
    %56 = arith.addf %52, %55 : vector<8x8xf32>
    %c1_50 = arith.constant 1 : index
    %c0_51 = arith.constant 0 : index
    %c0_52 = arith.constant 0 : index
    %57 = vector.load %arg6[%c1_50, %c0_51, %c0_52] : memref<4x32x8xf32, #tpu.memory_space<vmem>>, vector<1x32x8xf32>
    %58 = vector.shape_cast %57 : vector<1x32x8xf32> to vector<32x8xf32>
    %cst_53 = arith.constant dense<0.000000e+00> : vector<8x8xf32>
    %59 = tpu.matmul %5, %58, %cst_53 {dimension_numbers = #tpu.dot_dimension_numbers<[1], [0], [0], [1], [0, 0, 1, 1], [], []>} : vector<8x32xf32>, vector<32x8xf32>, vector<8x8xf32> -> vector<8x8xf32>
    %c1_54 = arith.constant 1 : index
    %c0_55 = arith.constant 0 : index
    %c0_56 = arith.constant 0 : index
    %60 = vector.load %arg9[%c1_54, %c0_55, %c0_56] : memref<4x1x8xf32, #tpu.memory_space<vmem>>, vector<1x1x8xf32>
    %61 = vector.shape_cast %60 : vector<1x1x8xf32> to vector<1x8xf32>
    %62 = vector.broadcast %61 : vector<1x8xf32> to vector<8x8xf32>
    %63 = arith.addf %59, %62 : vector<8x8xf32>
    %cst_57 = arith.constant dense<0.000000e+00> : vector<8x8xf32>
    %64 = tpu.matmul %49, %56, %cst_57 {dimension_numbers = #tpu.dot_dimension_numbers<[1], [1], [0], [0], [0, 0, 1, 0], [], []>} : vector<8x8xf32>, vector<8x8xf32>, vector<8x8xf32> -> vector<8x8xf32>
    %cst_58 = arith.constant dense<0xFF800000> : vector<8xf32>
    %65 = vector.multi_reduction <maximumf>, %64, %cst_58 [1] : vector<8x8xf32> to vector<8xf32>
    %66 = vector.shape_cast %65 : vector<8xf32> to vector<8x1xf32>
    %67 = vector.broadcast %66 : vector<8x1xf32> to vector<8x8xf32>
    %68 = arith.subf %64, %67 : vector<8x8xf32>
    %69 = math.exp %68 : vector<8x8xf32>
    %cst_59 = arith.constant dense<0.000000e+00> : vector<8xf32>
    %70 = vector.multi_reduction <add>, %69, %cst_59 [1] : vector<8x8xf32> to vector<8xf32>
    %71 = vector.shape_cast %70 : vector<8xf32> to vector<8x1xf32>
    %72 = vector.broadcast %71 : vector<8x1xf32> to vector<8x8xf32>
    %73 = arith.divf %69, %72 : vector<8x8xf32>
    %cst_60 = arith.constant dense<0.000000e+00> : vector<8x8xf32>
    %74 = tpu.matmul %73, %63, %cst_60 {dimension_numbers = #tpu.dot_dimension_numbers<[1], [0], [0], [1], [0, 0, 1, 1], [], []>} : vector<8x8xf32>, vector<8x8xf32>, vector<8x8xf32> -> vector<8x8xf32>
    %c1_61 = arith.constant 1 : index
    %c0_62 = arith.constant 0 : index
    %c0_63 = arith.constant 0 : index
    %75 = vector.load %arg10[%c1_61, %c0_62, %c0_63] : memref<4x8x32xf32, #tpu.memory_space<vmem>>, vector<1x8x32xf32>
    %76 = vector.shape_cast %75 : vector<1x8x32xf32> to vector<8x32xf32>
    %cst_64 = arith.constant dense<0.000000e+00> : vector<8x32xf32>
    %77 = tpu.matmul %74, %76, %cst_64 {dimension_numbers = #tpu.dot_dimension_numbers<[1], [0], [0], [1], [0, 0, 1, 1], [], []>} : vector<8x8xf32>, vector<8x32xf32>, vector<8x32xf32> -> vector<8x32xf32>
    %78 = arith.addf %42, %77 : vector<8x32xf32>
    %c2 = arith.constant 2 : index
    %c0_65 = arith.constant 0 : index
    %c0_66 = arith.constant 0 : index
    %79 = vector.load %arg4[%c2, %c0_65, %c0_66] : memref<4x32x8xf32, #tpu.memory_space<vmem>>, vector<1x32x8xf32>
    %80 = vector.shape_cast %79 : vector<1x32x8xf32> to vector<32x8xf32>
    %cst_67 = arith.constant dense<0.000000e+00> : vector<8x8xf32>
    %81 = tpu.matmul %1, %80, %cst_67 {dimension_numbers = #tpu.dot_dimension_numbers<[1], [0], [0], [1], [0, 0, 1, 1], [], []>} : vector<8x32xf32>, vector<32x8xf32>, vector<8x8xf32> -> vector<8x8xf32>
    %c2_68 = arith.constant 2 : index
    %c0_69 = arith.constant 0 : index
    %c0_70 = arith.constant 0 : index
    %82 = vector.load %arg7[%c2_68, %c0_69, %c0_70] : memref<4x1x8xf32, #tpu.memory_space<vmem>>, vector<1x1x8xf32>
    %83 = vector.shape_cast %82 : vector<1x1x8xf32> to vector<1x8xf32>
    %84 = vector.broadcast %83 : vector<1x8xf32> to vector<8x8xf32>
    %85 = arith.addf %81, %84 : vector<8x8xf32>
    %c2_71 = arith.constant 2 : index
    %c0_72 = arith.constant 0 : index
    %c0_73 = arith.constant 0 : index
    %86 = vector.load %arg5[%c2_71, %c0_72, %c0_73] : memref<4x32x8xf32, #tpu.memory_space<vmem>>, vector<1x32x8xf32>
    %87 = vector.shape_cast %86 : vector<1x32x8xf32> to vector<32x8xf32>
    %cst_74 = arith.constant dense<0.000000e+00> : vector<8x8xf32>
    %88 = tpu.matmul %3, %87, %cst_74 {dimension_numbers = #tpu.dot_dimension_numbers<[1], [0], [0], [1], [0, 0, 1, 1], [], []>} : vector<8x32xf32>, vector<32x8xf32>, vector<8x8xf32> -> vector<8x8xf32>
    %c2_75 = arith.constant 2 : index
    %c0_76 = arith.constant 0 : index
    %c0_77 = arith.constant 0 : index
    %89 = vector.load %arg8[%c2_75, %c0_76, %c0_77] : memref<4x1x8xf32, #tpu.memory_space<vmem>>, vector<1x1x8xf32>
    %90 = vector.shape_cast %89 : vector<1x1x8xf32> to vector<1x8xf32>
    %91 = vector.broadcast %90 : vector<1x8xf32> to vector<8x8xf32>
    %92 = arith.addf %88, %91 : vector<8x8xf32>
    %c2_78 = arith.constant 2 : index
    %c0_79 = arith.constant 0 : index
    %c0_80 = arith.constant 0 : index
    %93 = vector.load %arg6[%c2_78, %c0_79, %c0_80] : memref<4x32x8xf32, #tpu.memory_space<vmem>>, vector<1x32x8xf32>
    %94 = vector.shape_cast %93 : vector<1x32x8xf32> to vector<32x8xf32>
    %cst_81 = arith.constant dense<0.000000e+00> : vector<8x8xf32>
    %95 = tpu.matmul %5, %94, %cst_81 {dimension_numbers = #tpu.dot_dimension_numbers<[1], [0], [0], [1], [0, 0, 1, 1], [], []>} : vector<8x32xf32>, vector<32x8xf32>, vector<8x8xf32> -> vector<8x8xf32>
    %c2_82 = arith.constant 2 : index
    %c0_83 = arith.constant 0 : index
    %c0_84 = arith.constant 0 : index
    %96 = vector.load %arg9[%c2_82, %c0_83, %c0_84] : memref<4x1x8xf32, #tpu.memory_space<vmem>>, vector<1x1x8xf32>
    %97 = vector.shape_cast %96 : vector<1x1x8xf32> to vector<1x8xf32>
    %98 = vector.broadcast %97 : vector<1x8xf32> to vector<8x8xf32>
    %99 = arith.addf %95, %98 : vector<8x8xf32>
    %cst_85 = arith.constant dense<0.000000e+00> : vector<8x8xf32>
    %100 = tpu.matmul %85, %92, %cst_85 {dimension_numbers = #tpu.dot_dimension_numbers<[1], [1], [0], [0], [0, 0, 1, 0], [], []>} : vector<8x8xf32>, vector<8x8xf32>, vector<8x8xf32> -> vector<8x8xf32>
    %cst_86 = arith.constant dense<0xFF800000> : vector<8xf32>
    %101 = vector.multi_reduction <maximumf>, %100, %cst_86 [1] : vector<8x8xf32> to vector<8xf32>
    %102 = vector.shape_cast %101 : vector<8xf32> to vector<8x1xf32>
    %103 = vector.broadcast %102 : vector<8x1xf32> to vector<8x8xf32>
    %104 = arith.subf %100, %103 : vector<8x8xf32>
    %105 = math.exp %104 : vector<8x8xf32>
    %cst_87 = arith.constant dense<0.000000e+00> : vector<8xf32>
    %106 = vector.multi_reduction <add>, %105, %cst_87 [1] : vector<8x8xf32> to vector<8xf32>
    %107 = vector.shape_cast %106 : vector<8xf32> to vector<8x1xf32>
    %108 = vector.broadcast %107 : vector<8x1xf32> to vector<8x8xf32>
    %109 = arith.divf %105, %108 : vector<8x8xf32>
    %cst_88 = arith.constant dense<0.000000e+00> : vector<8x8xf32>
    %110 = tpu.matmul %109, %99, %cst_88 {dimension_numbers = #tpu.dot_dimension_numbers<[1], [0], [0], [1], [0, 0, 1, 1], [], []>} : vector<8x8xf32>, vector<8x8xf32>, vector<8x8xf32> -> vector<8x8xf32>
    %c2_89 = arith.constant 2 : index
    %c0_90 = arith.constant 0 : index
    %c0_91 = arith.constant 0 : index
    %111 = vector.load %arg10[%c2_89, %c0_90, %c0_91] : memref<4x8x32xf32, #tpu.memory_space<vmem>>, vector<1x8x32xf32>
    %112 = vector.shape_cast %111 : vector<1x8x32xf32> to vector<8x32xf32>
    %cst_92 = arith.constant dense<0.000000e+00> : vector<8x32xf32>
    %113 = tpu.matmul %110, %112, %cst_92 {dimension_numbers = #tpu.dot_dimension_numbers<[1], [0], [0], [1], [0, 0, 1, 1], [], []>} : vector<8x8xf32>, vector<8x32xf32>, vector<8x32xf32> -> vector<8x32xf32>
    %114 = arith.addf %78, %113 : vector<8x32xf32>
    %c3 = arith.constant 3 : index
    %c0_93 = arith.constant 0 : index
    %c0_94 = arith.constant 0 : index
    %115 = vector.load %arg4[%c3, %c0_93, %c0_94] : memref<4x32x8xf32, #tpu.memory_space<vmem>>, vector<1x32x8xf32>
    %116 = vector.shape_cast %115 : vector<1x32x8xf32> to vector<32x8xf32>
    %cst_95 = arith.constant dense<0.000000e+00> : vector<8x8xf32>
    %117 = tpu.matmul %1, %116, %cst_95 {dimension_numbers = #tpu.dot_dimension_numbers<[1], [0], [0], [1], [0, 0, 1, 1], [], []>} : vector<8x32xf32>, vector<32x8xf32>, vector<8x8xf32> -> vector<8x8xf32>
    %c3_96 = arith.constant 3 : index
    %c0_97 = arith.constant 0 : index
    %c0_98 = arith.constant 0 : index
    %118 = vector.load %arg7[%c3_96, %c0_97, %c0_98] : memref<4x1x8xf32, #tpu.memory_space<vmem>>, vector<1x1x8xf32>
    %119 = vector.shape_cast %118 : vector<1x1x8xf32> to vector<1x8xf32>
    %120 = vector.broadcast %119 : vector<1x8xf32> to vector<8x8xf32>
    %121 = arith.addf %117, %120 : vector<8x8xf32>
    %c3_99 = arith.constant 3 : index
    %c0_100 = arith.constant 0 : index
    %c0_101 = arith.constant 0 : index
    %122 = vector.load %arg5[%c3_99, %c0_100, %c0_101] : memref<4x32x8xf32, #tpu.memory_space<vmem>>, vector<1x32x8xf32>
    %123 = vector.shape_cast %122 : vector<1x32x8xf32> to vector<32x8xf32>
    %cst_102 = arith.constant dense<0.000000e+00> : vector<8x8xf32>
    %124 = tpu.matmul %3, %123, %cst_102 {dimension_numbers = #tpu.dot_dimension_numbers<[1], [0], [0], [1], [0, 0, 1, 1], [], []>} : vector<8x32xf32>, vector<32x8xf32>, vector<8x8xf32> -> vector<8x8xf32>
    %c3_103 = arith.constant 3 : index
    %c0_104 = arith.constant 0 : index
    %c0_105 = arith.constant 0 : index
    %125 = vector.load %arg8[%c3_103, %c0_104, %c0_105] : memref<4x1x8xf32, #tpu.memory_space<vmem>>, vector<1x1x8xf32>
    %126 = vector.shape_cast %125 : vector<1x1x8xf32> to vector<1x8xf32>
    %127 = vector.broadcast %126 : vector<1x8xf32> to vector<8x8xf32>
    %128 = arith.addf %124, %127 : vector<8x8xf32>
    %c3_106 = arith.constant 3 : index
    %c0_107 = arith.constant 0 : index
    %c0_108 = arith.constant 0 : index
    %129 = vector.load %arg6[%c3_106, %c0_107, %c0_108] : memref<4x32x8xf32, #tpu.memory_space<vmem>>, vector<1x32x8xf32>
    %130 = vector.shape_cast %129 : vector<1x32x8xf32> to vector<32x8xf32>
    %cst_109 = arith.constant dense<0.000000e+00> : vector<8x8xf32>
    %131 = tpu.matmul %5, %130, %cst_109 {dimension_numbers = #tpu.dot_dimension_numbers<[1], [0], [0], [1], [0, 0, 1, 1], [], []>} : vector<8x32xf32>, vector<32x8xf32>, vector<8x8xf32> -> vector<8x8xf32>
    %c3_110 = arith.constant 3 : index
    %c0_111 = arith.constant 0 : index
    %c0_112 = arith.constant 0 : index
    %132 = vector.load %arg9[%c3_110, %c0_111, %c0_112] : memref<4x1x8xf32, #tpu.memory_space<vmem>>, vector<1x1x8xf32>
    %133 = vector.shape_cast %132 : vector<1x1x8xf32> to vector<1x8xf32>
    %134 = vector.broadcast %133 : vector<1x8xf32> to vector<8x8xf32>
    %135 = arith.addf %131, %134 : vector<8x8xf32>
    %cst_113 = arith.constant dense<0.000000e+00> : vector<8x8xf32>
    %136 = tpu.matmul %121, %128, %cst_113 {dimension_numbers = #tpu.dot_dimension_numbers<[1], [1], [0], [0], [0, 0, 1, 0], [], []>} : vector<8x8xf32>, vector<8x8xf32>, vector<8x8xf32> -> vector<8x8xf32>
    %cst_114 = arith.constant dense<0xFF800000> : vector<8xf32>
    %137 = vector.multi_reduction <maximumf>, %136, %cst_114 [1] : vector<8x8xf32> to vector<8xf32>
    %138 = vector.shape_cast %137 : vector<8xf32> to vector<8x1xf32>
    %139 = vector.broadcast %138 : vector<8x1xf32> to vector<8x8xf32>
    %140 = arith.subf %136, %139 : vector<8x8xf32>
    %141 = math.exp %140 : vector<8x8xf32>
    %cst_115 = arith.constant dense<0.000000e+00> : vector<8xf32>
    %142 = vector.multi_reduction <add>, %141, %cst_115 [1] : vector<8x8xf32> to vector<8xf32>
    %143 = vector.shape_cast %142 : vector<8xf32> to vector<8x1xf32>
    %144 = vector.broadcast %143 : vector<8x1xf32> to vector<8x8xf32>
    %145 = arith.divf %141, %144 : vector<8x8xf32>
    %cst_116 = arith.constant dense<0.000000e+00> : vector<8x8xf32>
    %146 = tpu.matmul %145, %135, %cst_116 {dimension_numbers = #tpu.dot_dimension_numbers<[1], [0], [0], [1], [0, 0, 1, 1], [], []>} : vector<8x8xf32>, vector<8x8xf32>, vector<8x8xf32> -> vector<8x8xf32>
    %c3_117 = arith.constant 3 : index
    %c0_118 = arith.constant 0 : index
    %c0_119 = arith.constant 0 : index
    %147 = vector.load %arg10[%c3_117, %c0_118, %c0_119] : memref<4x8x32xf32, #tpu.memory_space<vmem>>, vector<1x8x32xf32>
    %148 = vector.shape_cast %147 : vector<1x8x32xf32> to vector<8x32xf32>
    %cst_120 = arith.constant dense<0.000000e+00> : vector<8x32xf32>
    %149 = tpu.matmul %146, %148, %cst_120 {dimension_numbers = #tpu.dot_dimension_numbers<[1], [0], [0], [1], [0, 0, 1, 1], [], []>} : vector<8x8xf32>, vector<8x32xf32>, vector<8x32xf32> -> vector<8x32xf32>
    %150 = arith.addf %114, %149 : vector<8x32xf32>
    %c0_121 = arith.constant 0 : index
    %c0_122 = arith.constant 0 : index
    %151 = vector.load %arg11[%c0_121, %c0_122] : memref<1x32xf32, #tpu.memory_space<vmem>>, vector<1x32xf32>
    %152 = vector.broadcast %151 : vector<1x32xf32> to vector<8x32xf32>
    %153 = arith.addf %150, %152 : vector<8x32xf32>
    %c0_123 = arith.constant 0 : index
    %c0_124 = arith.constant 0 : index
    %c0_125 = arith.constant 0 : index
    %154 = vector.load %arg12[%c0_123, %c0_124, %c0_125] : memref<1x8x32xf32, #tpu.memory_space<vmem>>, vector<1x8x32xf32>
    %155 = vector.shape_cast %154 : vector<1x8x32xf32> to vector<8x32xf32>
    %156 = vector.shape_cast %153 : vector<8x32xf32> to vector<1x8x32xf32>
    tpu.vector_store %arg12[%c0_123, %c0_124, %c0_125], %156 {strides = array<i32>} : memref<1x8x32xf32, #tpu.memory_space<vmem>>, vector<1x8x32xf32>,
    return
  }
  func.func @transform_0(%arg0: i32) -> (i32, i32, i32) {
    %c0_i32 = arith.constant 0 : i32
    %c0_i32_0 = arith.constant 0 : i32
    %c0_i32_1 = arith.constant 0 : i32
    return %arg0, %c0_i32, %c0_i32_0 : i32, i32, i32
  }
  func.func @transform_1(%arg0: i32) -> (i32, i32, i32) {
    %c0_i32 = arith.constant 0 : i32
    %c0_i32_0 = arith.constant 0 : i32
    %c0_i32_1 = arith.constant 0 : i32
    return %arg0, %c0_i32, %c0_i32_0 : i32, i32, i32
  }
  func.func @transform_2(%arg0: i32) -> (i32, i32, i32) {
    %c0_i32 = arith.constant 0 : i32
    %c0_i32_0 = arith.constant 0 : i32
    %c0_i32_1 = arith.constant 0 : i32
    return %arg0, %c0_i32, %c0_i32_0 : i32, i32, i32
  }
  func.func @transform_3(%arg0: i32) -> (i32, i32, i32) {
    %c0_i32 = arith.constant 0 : i32
    %c0_i32_0 = arith.constant 0 : i32
    %c0_i32_1 = arith.constant 0 : i32
    %c0_i32_2 = arith.constant 0 : i32
    return %c0_i32, %c0_i32_0, %c0_i32_1 : i32, i32, i32
  }
  func.func @transform_4(%arg0: i32) -> (i32, i32, i32) {
    %c0_i32 = arith.constant 0 : i32
    %c0_i32_0 = arith.constant 0 : i32
    %c0_i32_1 = arith.constant 0 : i32
    %c0_i32_2 = arith.constant 0 : i32
    return %c0_i32, %c0_i32_0, %c0_i32_1 : i32, i32, i32
  }
  func.func @transform_5(%arg0: i32) -> (i32, i32, i32) {
    %c0_i32 = arith.constant 0 : i32
    %c0_i32_0 = arith.constant 0 : i32
    %c0_i32_1 = arith.constant 0 : i32
    %c0_i32_2 = arith.constant 0 : i32
    return %c0_i32, %c0_i32_0, %c0_i32_1 : i32, i32, i32
  }
  func.func @transform_6(%arg0: i32) -> (i32, i32, i32) {
    %c0_i32 = arith.constant 0 : i32
    %c0_i32_0 = arith.constant 0 : i32
    %c0_i32_1 = arith.constant 0 : i32
    %c0_i32_2 = arith.constant 0 : i32
    return %c0_i32, %c0_i32_0, %c0_i32_1 : i32, i32, i32
  }
  func.func @transform_7(%arg0: i32) -> (i32, i32, i32) {
    %c0_i32 = arith.constant 0 : i32
    %c0_i32_0 = arith.constant 0 : i32
    %c0_i32_1 = arith.constant 0 : i32
    %c0_i32_2 = arith.constant 0 : i32
    return %c0_i32, %c0_i32_0, %c0_i32_1 : i32, i32, i32
  }
  func.func @transform_8(%arg0: i32) -> (i32, i32, i32) {
    %c0_i32 = arith.constant 0 : i32
    %c0_i32_0 = arith.constant 0 : i32
    %c0_i32_1 = arith.constant 0 : i32
    %c0_i32_2 = arith.constant 0 : i32
    return %c0_i32, %c0_i32_0, %c0_i32_1 : i32, i32, i32
  }
  func.func @transform_9(%arg0: i32) -> (i32, i32, i32) {
    %c0_i32 = arith.constant 0 : i32
    %c0_i32_0 = arith.constant 0 : i32
    %c0_i32_1 = arith.constant 0 : i32
    %c0_i32_2 = arith.constant 0 : i32
    return %c0_i32, %c0_i32_0, %c0_i32_1 : i32, i32, i32
  }
  func.func @transform_10(%arg0: i32) -> (i32, i32) {
    %c0_i32 = arith.constant 0 : i32
    %c0_i32_0 = arith.constant 0 : i32
    %c0_i32_1 = arith.constant 0 : i32
    return %c0_i32, %c0_i32_0 : i32, i32
  }
  func.func @transform_11(%arg0: i32) -> (i32, i32, i32) {
    %c0_i32 = arith.constant 0 : i32
    %c0_i32_0 = arith.constant 0 : i32
    %c0_i32_1 = arith.constant 0 : i32
    return %arg0, %c0_i32, %c0_i32_0 : i32, i32, i32
  }
}

</mosaic_0001>

<llo_original>
// kernel: multi_head_attention.1
$region0: #{multi_head_attention.1}
  #allocation0 [shape = 'u32[]', space=smem, size = 0x4, offset = 0x4, fixed_abs, tag = 'smem constant byte address 0x4 - core index']
  #allocation1 [shape = 'u32[72,128]{1,0:T(1,128)}', space=vmem, size = 0x9000, scoped, tag = 'internal scratch']
  %s0 = inlined_call_operand.vmem [shape: f32[2,8,32], index: 0, kind: input, shape index: {}]
  %s1 = inlined_call_operand.vmem [shape: f32[2,8,32], index: 1, kind: input, shape index: {}]
  %s2 = inlined_call_operand.vmem [shape: f32[2,8,32], index: 2, kind: input, shape index: {}]
  %s3 = inlined_call_operand.vmem [shape: f32[4,32,8], index: 3, kind: input, shape index: {}]
  %s4 = inlined_call_operand.vmem [shape: f32[4,32,8], index: 4, kind: input, shape index: {}]
  %s5 = inlined_call_operand.vmem [shape: f32[4,32,8], index: 5, kind: input, shape index: {}]
  %s6 = inlined_call_operand.vmem [shape: f32[4,1,8], index: 6, kind: input, shape index: {}]
  %s7 = inlined_call_operand.vmem [shape: f32[4,1,8], index: 7, kind: input, shape index: {}]
  %s8 = inlined_call_operand.vmem [shape: f32[4,1,8], index: 8, kind: input, shape index: {}]
  %s9 = inlined_call_operand.vmem [shape: f32[4,8,32], index: 9, kind: input, shape index: {}]
  %s10 = inlined_call_operand.vmem [shape: f32[1,32], index: 10, kind: input, shape index: {}]
  %s11 = inlined_call_operand.hbm [shape: f32[2,8,32], index: 11, kind: output, shape index: {}]
  %s12 = sld [smem:[#allocation0]]
  $region77: #{multi_head_attention.1} parent=0
    _
  %s14 = ssub.s32 1, %s12
  %s15 = scalar_select 0, %s14, %s12
  $region1: #{multi_head_attention.1} parent=0
    #allocation2 [shape = 'u8[8192]{0}', space=vmem, size = 0x2000, scoped, tag = 'output window, operand 0']
    #allocation3 [shape = 's32[2]{0}', space=sflag, size = 0x8, scoped, tag = 'scoped memory for multi_head_attention.1']
    %16 = vsyncpa [#allocation3], 0
    %s17 = scalar_lea.sflag [#allocation3], 1
    %18 = vsyncpa %s17, 0
    loop: start=0, step=1, limit=4
    $region2: #{multi_head_attention.1} parent=1 // loop_pre_header
      _
    $region3: #{multi_head_attention.1} parent=1 // loop_header
      %s20 = sphi 0, %s24
      %p21 = scmp.ge.s32.totalorder %s20, 4
      %s30 = sphi 0, %s32
      %s33 = sphi 0, %s30
      %s34 = sphi 0, %s33
      %s50 = sphi 0, %s34
      %s56 = sphi 0, %s58
      %s59 = sphi 0, %s56
      %s60 = sphi 0, %s59
      %s76 = sphi 0, %s60
      %s82 = sphi 0, %s84
      %s85 = sphi 0, %s82
      %s86 = sphi 0, %s85
      %s102 = sphi 0, %s86
      %s106 = sphi 0, %s106
      %s108 = sphi 0, %s106
      %s109 = sphi 0, %s108
      %s123 = sphi 0, %s109
      %s127 = sphi 0, %s127
      %s129 = sphi 0, %s127
      %s130 = sphi 0, %s129
      %s144 = sphi 0, %s130
      %s148 = sphi 0, %s148
      %s150 = sphi 0, %s148
      %s151 = sphi 0, %s150
      %s165 = sphi 0, %s151
      %s169 = sphi 0, %s169
      %s171 = sphi 0, %s169
      %s172 = sphi 0, %s171
      %s186 = sphi 0, %s172
      %s190 = sphi 0, %s190
      %s192 = sphi 0, %s190
      %s193 = sphi 0, %s192
      %s207 = sphi 0, %s193
      %s211 = sphi 0, %s211
      %s213 = sphi 0, %s211
      %s214 = sphi 0, %s213
      %s228 = sphi 0, %s214
      %s232 = sphi 0, %s232
      %s234 = sphi 0, %s232
      %s235 = sphi 0, %s234
      %s249 = sphi 0, %s235
      %s253 = sphi 0, %s253
      %s255 = sphi 0, %s253
      %s256 = sphi 0, %s255
      %s270 = sphi 0, %s256
      %s276 = sphi 0, %s278
      %s279 = sphi 0, %s276
      %s280 = sphi 0, %s279
      %s296 = sphi 0, %s280
    $region4: #{multi_head_attention.1} parent=1 // loop_header_branch
      %23 = sbr.rel (%p21) target = $region8
    $region5: #{multi_head_attention.1} parent=1 // loop_body
      %s25 = ssub.s32 %s20, 1
      %s26 = ssub.s32 %s20, 2
      %s27 = sadd.s32 %s20, 1
      %s28 = ssub.s32 %s20, %s27
      %p29 = scmp.eq.s32.totalorder %s28, 0
      %s31 = sadd.s32 %s30, 1
      %s32 = scalar_select %p29, %s30, %s31
      %p35 = pneg %p29
      %p36 = scmp.eq.s32.totalorder %s20, 1
      %p37 = por %p35, %p36
      %p38 = scmp.ne.s32.totalorder %s30, %s33
      %p39 = scmp.eq.s32.totalorder %s20, 0
      %p40 = por %p38, %p39
      %p41 = scmp.ne.s32.totalorder %s30, %s33
      %p42 = scmp.eq.s32.totalorder %s25, 1
      %p43 = por %p41, %p42
      %p44 = scmp.ne.s32.totalorder %s33, %s34
      %p45 = scmp.eq.s32.totalorder %s25, 0
      %p46 = por %p44, %p45
      %p47 = scmp.ne.s32.totalorder %s33, %s34
      %p48 = scmp.eq.s32.totalorder %s26, 1
      %p49 = por %p47, %p48
      %p51 = scmp.ne.s32.totalorder %s34, %s50
      %p52 = scmp.eq.s32.totalorder %s26, 0
      %p53 = por %p51, %p52
      %s54 = ssub.s32 %s20, %s27
      %p55 = scmp.eq.s32.totalorder %s54, 0
      %s57 = sadd.s32 %s56, 1
      %s58 = scalar_select %p55, %s56, %s57
      %p61 = pneg %p55
      %p62 = scmp.eq.s32.totalorder %s20, 1
      %p63 = por %p61, %p62
      %p64 = scmp.ne.s32.totalorder %s56, %s59
      %p65 = scmp.eq.s32.totalorder %s20, 0
      %p66 = por %p64, %p65
      %p67 = scmp.ne.s32.totalorder %s56, %s59
      %p68 = scmp.eq.s32.totalorder %s25, 1
      %p69 = por %p67, %p68
      %p70 = scmp.ne.s32.totalorder %s59, %s60
      %p71 = scmp.eq.s32.totalorder %s25, 0
      %p72 = por %p70, %p71
      %p73 = scmp.ne.s32.totalorder %s59, %s60
      %p74 = scmp.eq.s32.totalorder %s26, 1
      %p75 = por %p73, %p74
      %p77 = scmp.ne.s32.totalorder %s60, %s76
      %p78 = scmp.eq.s32.totalorder %s26, 0
      %p79 = por %p77, %p78
      %s80 = ssub.s32 %s20, %s27
      %p81 = scmp.eq.s32.totalorder %s80, 0
      %s83 = sadd.s32 %s82, 1
      %s84 = scalar_select %p81, %s82, %s83
      %p87 = pneg %p81
      %p88 = scmp.eq.s32.totalorder %s20, 1
      %p89 = por %p87, %p88
      %p90 = scmp.ne.s32.totalorder %s82, %s85
      %p91 = scmp.eq.s32.totalorder %s20, 0
      %p92 = por %p90, %p91
      %p93 = scmp.ne.s32.totalorder %s82, %s85
      %p94 = scmp.eq.s32.totalorder %s25, 1
      %p95 = por %p93, %p94
      %p96 = scmp.ne.s32.totalorder %s85, %s86
      %p97 = scmp.eq.s32.totalorder %s25, 0
      %p98 = por %p96, %p97
      %p99 = scmp.ne.s32.totalorder %s85, %s86
      %p100 = scmp.eq.s32.totalorder %s26, 1
      %p101 = por %p99, %p100
      %p103 = scmp.ne.s32.totalorder %s86, %s102
      %p104 = scmp.eq.s32.totalorder %s26, 0
      %p105 = por %p103, %p104
      %s107 = sadd.s32 %s106, 1
      %p110 = scmp.eq.s32.totalorder %s20, 1
      %p111 = scmp.ne.s32.totalorder %s106, %s108
      %p112 = scmp.eq.s32.totalorder %s20, 0
      %p113 = por %p111, %p112
      %p114 = scmp.ne.s32.totalorder %s106, %s108
      %p115 = scmp.eq.s32.totalorder %s25, 1
      %p116 = por %p114, %p115
      %p117 = scmp.ne.s32.totalorder %s108, %s109
      %p118 = scmp.eq.s32.totalorder %s25, 0
      %p119 = por %p117, %p118
      %p120 = scmp.ne.s32.totalorder %s108, %s109
      %p121 = scmp.eq.s32.totalorder %s26, 1
      %p122 = por %p120, %p121
      %p124 = scmp.ne.s32.totalorder %s109, %s123
      %p125 = scmp.eq.s32.totalorder %s26, 0
      %p126 = por %p124, %p125
      %s128 = sadd.s32 %s127, 1
      %p131 = scmp.eq.s32.totalorder %s20, 1
      %p132 = scmp.ne.s32.totalorder %s127, %s129
      %p133 = scmp.eq.s32.totalorder %s20, 0
      %p134 = por %p132, %p133
      %p135 = scmp.ne.s32.totalorder %s127, %s129
      %p136 = scmp.eq.s32.totalorder %s25, 1
      %p137 = por %p135, %p136
      %p138 = scmp.ne.s32.totalorder %s129, %s130
      %p139 = scmp.eq.s32.totalorder %s25, 0
      %p140 = por %p138, %p139
      %p141 = scmp.ne.s32.totalorder %s129, %s130
      %p142 = scmp.eq.s32.totalorder %s26, 1
      %p143 = por %p141, %p142
      %p145 = scmp.ne.s32.totalorder %s130, %s144
      %p146 = scmp.eq.s32.totalorder %s26, 0
      %p147 = por %p145, %p146
      %s149 = sadd.s32 %s148, 1
      %p152 = scmp.eq.s32.totalorder %s20, 1
      %p153 = scmp.ne.s32.totalorder %s148, %s150
      %p154 = scmp.eq.s32.totalorder %s20, 0
      %p155 = por %p153, %p154
      %p156 = scmp.ne.s32.totalorder %s148, %s150
      %p157 = scmp.eq.s32.totalorder %s25, 1
      %p158 = por %p156, %p157
      %p159 = scmp.ne.s32.totalorder %s150, %s151
      %p160 = scmp.eq.s32.totalorder %s25, 0
      %p161 = por %p159, %p160
      %p162 = scmp.ne.s32.totalorder %s150, %s151
      %p163 = scmp.eq.s32.totalorder %s26, 1
      %p164 = por %p162, %p163
      %p166 = scmp.ne.s32.totalorder %s151, %s165
      %p167 = scmp.eq.s32.totalorder %s26, 0
      %p168 = por %p166, %p167
      %s170 = sadd.s32 %s169, 1
      %p173 = scmp.eq.s32.totalorder %s20, 1
      %p174 = scmp.ne.s32.totalorder %s169, %s171
      %p175 = scmp.eq.s32.totalorder %s20, 0
      %p176 = por %p174, %p175
      %p177 = scmp.ne.s32.totalorder %s169, %s171
      %p178 = scmp.eq.s32.totalorder %s25, 1
      %p179 = por %p177, %p178
      %p180 = scmp.ne.s32.totalorder %s171, %s172
      %p181 = scmp.eq.s32.totalorder %s25, 0
      %p182 = por %p180, %p181
      %p183 = scmp.ne.s32.totalorder %s171, %s172
      %p184 = scmp.eq.s32.totalorder %s26, 1
      %p185 = por %p183, %p184
      %p187 = scmp.ne.s32.totalorder %s172, %s186
      %p188 = scmp.eq.s32.totalorder %s26, 0
      %p189 = por %p187, %p188
      %s191 = sadd.s32 %s190, 1
      %p194 = scmp.eq.s32.totalorder %s20, 1
      %p195 = scmp.ne.s32.totalorder %s190, %s192
      %p196 = scmp.eq.s32.totalorder %s20, 0
      %p197 = por %p195, %p196
      %p198 = scmp.ne.s32.totalorder %s190, %s192
      %p199 = scmp.eq.s32.totalorder %s25, 1
      %p200 = por %p198, %p199
      %p201 = scmp.ne.s32.totalorder %s192, %s193
      %p202 = scmp.eq.s32.totalorder %s25, 0
      %p203 = por %p201, %p202
      %p204 = scmp.ne.s32.totalorder %s192, %s193
      %p205 = scmp.eq.s32.totalorder %s26, 1
      %p206 = por %p204, %p205
      %p208 = scmp.ne.s32.totalorder %s193, %s207
      %p209 = scmp.eq.s32.totalorder %s26, 0
      %p210 = por %p208, %p209
      %s212 = sadd.s32 %s211, 1
      %p215 = scmp.eq.s32.totalorder %s20, 1
      %p216 = scmp.ne.s32.totalorder %s211, %s213
      %p217 = scmp.eq.s32.totalorder %s20, 0
      %p218 = por %p216, %p217
      %p219 = scmp.ne.s32.totalorder %s211, %s213
      %p220 = scmp.eq.s32.totalorder %s25, 1
      %p221 = por %p219, %p220
      %p222 = scmp.ne.s32.totalorder %s213, %s214
      %p223 = scmp.eq.s32.totalorder %s25, 0
      %p224 = por %p222, %p223
      %p225 = scmp.ne.s32.totalorder %s213, %s214
      %p226 = scmp.eq.s32.totalorder %s26, 1
      %p227 = por %p225, %p226
      %p229 = scmp.ne.s32.totalorder %s214, %s228
      %p230 = scmp.eq.s32.totalorder %s26, 0
      %p231 = por %p229, %p230
      %s233 = sadd.s32 %s232, 1
      %p236 = scmp.eq.s32.totalorder %s20, 1
      %p237 = scmp.ne.s32.totalorder %s232, %s234
      %p238 = scmp.eq.s32.totalorder %s20, 0
      %p239 = por %p237, %p238
      %p240 = scmp.ne.s32.totalorder %s232, %s234
      %p241 = scmp.eq.s32.totalorder %s25, 1
      %p242 = por %p240, %p241
      %p243 = scmp.ne.s32.totalorder %s234, %s235
      %p244 = scmp.eq.s32.totalorder %s25, 0
      %p245 = por %p243, %p244
      %p246 = scmp.ne.s32.totalorder %s234, %s235
      %p247 = scmp.eq.s32.totalorder %s26, 1
      %p248 = por %p246, %p247
      %p250 = scmp.ne.s32.totalorder %s235, %s249
      %p251 = scmp.eq.s32.totalorder %s26, 0
      %p252 = por %p250, %p251
      %s254 = sadd.s32 %s253, 1
      %p257 = scmp.eq.s32.totalorder %s20, 1
      %p258 = scmp.ne.s32.totalorder %s253, %s255
      %p259 = scmp.eq.s32.totalorder %s20, 0
      %p260 = por %p258, %p259
      %p261 = scmp.ne.s32.totalorder %s253, %s255
      %p262 = scmp.eq.s32.totalorder %s25, 1
      %p263 = por %p261, %p262
      %p264 = scmp.ne.s32.totalorder %s255, %s256
      %p265 = scmp.eq.s32.totalorder %s25, 0
      %p266 = por %p264, %p265
      %p267 = scmp.ne.s32.totalorder %s255, %s256
      %p268 = scmp.eq.s32.totalorder %s26, 1
      %p269 = por %p267, %p268
      %p271 = scmp.ne.s32.totalorder %s256, %s270
      %p272 = scmp.eq.s32.totalorder %s26, 0
      %p273 = por %p271, %p272
      %s274 = ssub.s32 %s20, %s27
      %p275 = scmp.eq.s32.totalorder %s274, 0
      %s277 = sadd.s32 %s276, 1
      %s278 = scalar_select %p275, %s276, %s277
      %p281 = pneg %p275
      %p282 = scmp.eq.s32.totalorder %s20, 1
      %p283 = por %p281, %p282
      %p284 = scmp.ne.s32.totalorder %s276, %s279
      %p285 = scmp.eq.s32.totalorder %s20, 0
      %p286 = por %p284, %p285
      %p287 = scmp.ne.s32.totalorder %s276, %s279
      %p288 = scmp.eq.s32.totalorder %s25, 1
      %p289 = por %p287, %p288
      %p290 = scmp.ne.s32.totalorder %s279, %s280
      %p291 = scmp.eq.s32.totalorder %s25, 0
      %p292 = por %p290, %p291
      %p293 = scmp.ne.s32.totalorder %s279, %s280
      %p294 = scmp.eq.s32.totalorder %s26, 1
      %p295 = por %p293, %p294
      %p297 = scmp.ne.s32.totalorder %s280, %s296
      %p298 = scmp.eq.s32.totalorder %s26, 0
      %p299 = por %p297, %p298
      %p300 = scmp.le.s32.totalorder 1, %s20
      %p301 = scmp.lt.s32.totalorder %s20, 3
      %p302 = pnand %p300, %p301
      %p303 = pneg %p302
      // Predicated region
      $region9: #{multi_head_attention.1} parent=5 // pred_check
        _
      $region10: #{multi_head_attention.1} parent=5 // pred_check_branch
        %305 = sbr.rel (%p302) target = $region12
      $region11: #{multi_head_attention.1} parent=5 // pred_region
        %s306 = ssub.s32 %s20, 1
        // Predicated region
        $region13: #{multi_head_attention.1} parent=11 // pred_check
          %p307 = pneg %p119
        $region14: #{multi_head_attention.1} parent=11 // pred_check_branch
          %309 = sbr.rel (%p307) target = $region16
        $region15: #{multi_head_attention.1} parent=11 // pred_region
          _
        $region16: #{multi_head_attention.1} parent=11 // pred_fallthru
          _
        // Predicated region
        $region17: #{multi_head_attention.1} parent=11 // pred_check
          %p310 = pneg %p140
        $region18: #{multi_head_attention.1} parent=11 // pred_check_branch
          %312 = sbr.rel (%p310) target = $region20
        $region19: #{multi_head_attention.1} parent=11 // pred_region
          _
        $region20: #{multi_head_attention.1} parent=11 // pred_fallthru
          _
        // Predicated region
        $region21: #{multi_head_attention.1} parent=11 // pred_check
          %p313 = pneg %p161
        $region22: #{multi_head_attention.1} parent=11 // pred_check_branch
          %315 = sbr.rel (%p313) target = $region24
        $region23: #{multi_head_attention.1} parent=11 // pred_region
          _
        $region24: #{multi_head_attention.1} parent=11 // pred_fallthru
          _
        // Predicated region
        $region25: #{multi_head_attention.1} parent=11 // pred_check
          %p316 = pneg %p182
        $region26: #{multi_head_attention.1} parent=11 // pred_check_branch
          %318 = sbr.rel (%p316) target = $region28
        $region27: #{multi_head_attention.1} parent=11 // pred_region
          _
        $region28: #{multi_head_attention.1} parent=11 // pred_fallthru
          _
        // Predicated region
        $region29: #{multi_head_attention.1} parent=11 // pred_check
          %p319 = pneg %p203
        $region30: #{multi_head_attention.1} parent=11 // pred_check_branch
          %321 = sbr.rel (%p319) target = $region32
        $region31: #{multi_head_attention.1} parent=11 // pred_region
          _
        $region32: #{multi_head_attention.1} parent=11 // pred_fallthru
          _
        // Predicated region
        $region33: #{multi_head_attention.1} parent=11 // pred_check
          %p322 = pneg %p224
        $region34: #{multi_head_attention.1} parent=11 // pred_check_branch
          %324 = sbr.rel (%p322) target = $region36
        $region35: #{multi_head_attention.1} parent=11 // pred_region
          _
        $region36: #{multi_head_attention.1} parent=11 // pred_fallthru
          _
        // Predicated region
        $region37: #{multi_head_attention.1} parent=11 // pred_check
          %p325 = pneg %p245
        $region38: #{multi_head_attention.1} parent=11 // pred_check_branch
          %327 = sbr.rel (%p325) target = $region40
        $region39: #{multi_head_attention.1} parent=11 // pred_region
          _
        $region40: #{multi_head_attention.1} parent=11 // pred_fallthru
          _
        // Predicated region
        $region41: #{multi_head_attention.1} parent=11 // pred_check
          %p328 = pneg %p266
        $region42: #{multi_head_attention.1} parent=11 // pred_check_branch
          %330 = sbr.rel (%p328) target = $region44
        $region43: #{multi_head_attention.1} parent=11 // pred_region
          _
        $region44: #{multi_head_attention.1} parent=11 // pred_fallthru
          _
      $region12: #{multi_head_attention.1} parent=5 // pred_fallthru
        _
      %p331 = scmp.lt.s32.totalorder %s20, 2
      // Predicated region
      $region45: #{multi_head_attention.1} parent=5 // pred_check
        %p332 = pneg %p331
      $region46: #{multi_head_attention.1} parent=5 // pred_check_branch
        %334 = sbr.rel (%p332) target = $region48
      $region47: #{multi_head_attention.1} parent=5 // pred_region
        // Predicated region
        $region49: #{multi_head_attention.1} parent=47 // pred_check
          %p335 = pneg %p40
        $region50: #{multi_head_attention.1} parent=47 // pred_check_branch
          %337 = sbr.rel (%p335) target = $region52
        $region51: #{multi_head_attention.1} parent=47 // pred_region
          %p338 = scmp.lt.s32.totalorder %s20, 1
          %s339 = scalar_select %p338, %s20, 1
          %s340 = smul.addr %s339, 8
          %s341 = scalar_lea.vmem %s0, %s340
        $region52: #{multi_head_attention.1} parent=47 // pred_fallthru
          _
        // Predicated region
        $region53: #{multi_head_attention.1} parent=47 // pred_check
          %p342 = pneg %p66
        $region54: #{multi_head_attention.1} parent=47 // pred_check_branch
          %344 = sbr.rel (%p342) target = $region56
        $region55: #{multi_head_attention.1} parent=47 // pred_region
          %p345 = scmp.lt.s32.totalorder %s20, 1
          %s346 = scalar_select %p345, %s20, 1
          %s347 = smul.addr %s346, 8
          %s348 = scalar_lea.vmem %s1, %s347
        $region56: #{multi_head_attention.1} parent=47 // pred_fallthru
          _
        // Predicated region
        $region57: #{multi_head_attention.1} parent=47 // pred_check
          %p349 = pneg %p92
        $region58: #{multi_head_attention.1} parent=47 // pred_check_branch
          %351 = sbr.rel (%p349) target = $region60
        $region59: #{multi_head_attention.1} parent=47 // pred_region
          %p352 = scmp.lt.s32.totalorder %s20, 1
          %s353 = scalar_select %p352, %s20, 1
          %s354 = smul.addr %s353, 8
          %s355 = scalar_lea.vmem %s2, %s354
        $region60: #{multi_head_attention.1} parent=47 // pred_fallthru
          _
      $region48: #{multi_head_attention.1} parent=5 // pred_fallthru
        _
      %p356 = scmp.le.s32.totalorder 1, %s20
      %p357 = scmp.lt.s32.totalorder %s20, 3
      %p358 = pnand %p356, %p357
      %p359 = pneg %p358
      // Predicated region
      $region61: #{multi_head_attention.1} parent=5 // pred_check
        _
      $region62: #{multi_head_attention.1} parent=5 // pred_check_branch
        %361 = sbr.rel (%p358) target = $region64
      $region63: #{multi_head_attention.1} parent=5 // pred_region
        %s362 = ssub.s32 %s20, 1
        %p363 = scmp.lt.s32.totalorder %s25, 1
        %s364 = scalar_select %p363, %s25, 1
        %s365 = smul.addr %s364, 8
        %s366 = scalar_lea.vmem %s0, %s365
        %p367 = pneg %p46
        %p368 = pneg %p43
        %p369 = scmp.lt.s32.totalorder %s25, 1
        %s370 = scalar_select %p369, %s25, 1
        %s371 = smul.addr %s370, 8
        %s372 = scalar_lea.vmem %s1, %s371
        %p373 = pneg %p72
        %p374 = pneg %p69
        %p375 = scmp.lt.s32.totalorder %s25, 1
        %s376 = scalar_select %p375, %s25, 1
        %s377 = smul.addr %s376, 8
        %s378 = scalar_lea.vmem %s2, %s377
        %p379 = pneg %p98
        %p380 = pneg %p95
        %p381 = pneg %p119
        %p382 = pneg %p116
        %p383 = pneg %p140
        %p384 = pneg %p137
        %p385 = pneg %p161
        %p386 = pneg %p158
        %p387 = pneg %p182
        %p388 = pneg %p179
        %p389 = pneg %p203
        %p390 = pneg %p200
        %p391 = pneg %p224
        %p392 = pneg %p221
        %p393 = pneg %p245
        %p394 = pneg %p242
        %p395 = pneg %p266
        %p396 = pneg %p263
        %p397 = pneg %p292
        %p398 = pneg %p289
        %s399 = sand.u32 %s279, 1
        %s400 = scalar_lea.sflag [#allocation3], %s399
        %s401 = sand.u32 %s279, 1
        %s402 = smul.addr %s401, 8
        %s403 = scalar_lea.vmem [#allocation2], %s402
        %p404 = scmp.lt.s32.totalorder %s25, 1
        %s405 = scalar_select %p404, %s25, 1
        %s406 = smul.addr %s405, 8
        %s407 = scalar_lea.vmem %s0, %s406
        %p408 = scmp.lt.s32.totalorder %s25, 1
        %s409 = scalar_select %p408, %s25, 1
        %s410 = smul.addr %s409, 8
        %s411 = scalar_lea.vmem %s1, %s410
        %p412 = scmp.lt.s32.totalorder %s25, 1
        %s413 = scalar_select %p412, %s25, 1
        %s414 = smul.addr %s413, 8
        %s415 = scalar_lea.vmem %s2, %s414
        %v416 = vld [vmem:[%s407] sm:$0xff]
        %v417 = vld [vmem:[%s411] sm:$0xff]
        %v418 = vld [vmem:[%s415] sm:$0xff]
        %v419 = vld [vmem:[%s3] sm:$0xff]
        %v420 = vld [vmem:[%s3 + $0x8] sm:$0xff]
        %v421 = vld [vmem:[%s3 + $0x10] sm:$0xff]
        %v422 = vld [vmem:[%s3 + $0x18] sm:$0xff]
        %v423 = vld [vmem:[%s6] sm:$0x1]
        %v425 = vperm.slane %v423, 0
        %vm427 = vcmask 261120
        %v429 = vsel %vm427, %v416, 0
        %431 = vmatpush.msra.mxu0 0.0
        %432 = vmatpush.msra.mxu0 0.0
        %433 = vmatpush.msra.mxu0 0.0
        %434 = vmatpush.msra.mxu0 0.0
        %435 = vmatpush.msra.mxu0 0.0
        %436 = vmatpush.msra.mxu0 0.0
        %437 = vmatpush.msra.mxu0 0.0
        %438 = vmatpush.msra.mxu0 0.0
        %439 = vmatpush.msra.mxu0 0.0
        %440 = vmatpush.msra.mxu0 0.0
        %441 = vmatpush.msra.mxu0 0.0
        %442 = vmatpush.msra.mxu0 0.0
        %443 = vmatpush.msra.mxu0 %v422
        %444 = vmatpush.msra.mxu0 %v421
        %445 = vmatpush.msra.mxu0 %v420
        %446 = vmatpush.msra.mxu0 %v419
        %447 = vmatmul.f32.gmra.mxu0 %v429
        %v448 = vpop.f32.mrf.mxu0
        %v449 = vadd.f32 %v425, %v448
        %450 = vdwg.mxu0
        %v451 = vld [vmem:[%s4] sm:$0xff]
        %v452 = vld [vmem:[%s4 + $0x8] sm:$0xff]
        %v453 = vld [vmem:[%s4 + $0x10] sm:$0xff]
        %v454 = vld [vmem:[%s4 + $0x18] sm:$0xff]
        %v455 = vld [vmem:[%s7] sm:$0x1]
        %v457 = vperm.slane %v455, 0
        %v460 = vsel %vm427, %v417, 0
        %462 = vmatpush.msra.mxu0 0.0
        %463 = vmatpush.msra.mxu0 0.0
        %464 = vmatpush.msra.mxu0 0.0
        %465 = vmatpush.msra.mxu0 0.0
        %466 = vmatpush.msra.mxu0 0.0
        %467 = vmatpush.msra.mxu0 0.0
        %468 = vmatpush.msra.mxu0 0.0
        %469 = vmatpush.msra.mxu0 0.0
        %470 = vmatpush.msra.mxu0 0.0
        %471 = vmatpush.msra.mxu0 0.0
        %472 = vmatpush.msra.mxu0 0.0
        %473 = vmatpush.msra.mxu0 0.0
        %474 = vmatpush.msra.mxu0 %v454
        %475 = vmatpush.msra.mxu0 %v453
        %476 = vmatpush.msra.mxu0 %v452
        %477 = vmatpush.msra.mxu0 %v451
        %478 = vmatmul.f32.gmra.mxu0 %v460
        %v479 = vpop.f32.mrf.mxu0
        %v480 = vadd.f32 %v457, %v479
        %481 = vdwg.mxu0
        %v482 = vld [vmem:[%s5] sm:$0xff]
        %v483 = vld [vmem:[%s5 + $0x8] sm:$0xff]
        %v484 = vld [vmem:[%s5 + $0x10] sm:$0xff]
        %v485 = vld [vmem:[%s5 + $0x18] sm:$0xff]
        %v486 = vld [vmem:[%s8] sm:$0x1]
        %v488 = vperm.slane %v486, 0
        %v491 = vsel %vm427, %v418, 0
        %493 = vmatpush.msra.mxu0 0.0
        %494 = vmatpush.msra.mxu0 0.0
        %495 = vmatpush.msra.mxu0 0.0
        %496 = vmatpush.msra.mxu0 0.0
        %497 = vmatpush.msra.mxu0 0.0
        %498 = vmatpush.msra.mxu0 0.0
        %499 = vmatpush.msra.mxu0 0.0
        %500 = vmatpush.msra.mxu0 0.0
        %501 = vmatpush.msra.mxu0 0.0
        %502 = vmatpush.msra.mxu0 0.0
        %503 = vmatpush.msra.mxu0 0.0
        %504 = vmatpush.msra.mxu0 0.0
        %505 = vmatpush.msra.mxu0 %v485
        %506 = vmatpush.msra.mxu0 %v484
        %507 = vmatpush.msra.mxu0 %v483
        %508 = vmatpush.msra.mxu0 %v482
        %509 = vmatmul.f32.gmra.mxu0 %v491
        %v510 = vpop.f32.mrf.mxu0
        %v511 = vadd.f32 %v488, %v510
        %512 = vdwg.mxu0
        %vm513 = vcmask 64512
        %v515 = vsel %vm513, %v449, 0
        %v518 = vsel %vm513, %v480, 0
        %520 = vmatpush.xpose.msra.mxu0 0.0
        %521 = vmatpush.xpose.msra.mxu0 0.0
        %522 = vmatpush.xpose.msra.mxu0 0.0
        %523 = vmatpush.xpose.msra.mxu0 0.0
        %524 = vmatpush.xpose.msra.mxu0 0.0
        %525 = vmatpush.xpose.msra.mxu0 0.0
        %526 = vmatpush.xpose.msra.mxu0 0.0
        %527 = vmatpush.xpose.msra.mxu0 0.0
        %528 = vmatpush.xpose.msra.mxu0 0.0
        %529 = vmatpush.xpose.msra.mxu0 0.0
        %530 = vmatpush.xpose.msra.mxu0 0.0
        %531 = vmatpush.xpose.msra.mxu0 0.0
        %532 = vmatpush.xpose.msra.mxu0 0.0
        %533 = vmatpush.xpose.msra.mxu0 0.0
        %534 = vmatpush.xpose.msra.mxu0 0.0
        %535 = vmatpush.xpose.msra.mxu0 %v518
        %536 = vmatmul.f32.gmra.mxu0 %v515
        %v537 = vpop.f32.mrf.mxu0
        %v538 = vadd.f32 0.0, %v537
        %539 = vdwg.mxu0
        %v540 = vsel %vm513, %v538, -inf
        %541 = vmax.xlane.f32.xlu0 %v540
        %v542 = vpop.xlane.xlu0 %541
        %v543 = vsub.f32 %v538, %v542
        %v544 = vmul.f32 %v543, 1.442695
        %v545 = vpow.pop %v544
        %v546 = vsel %vm513, %v545, 0.0
        %547 = vadd.xlane.f32.xlu0 %v546
        %v548 = vpop.xlane.xlu0 %547
        %v549 = vrcp.pop %v548
        %v550 = vmul.f32 %v548, %v549
        %v551 = vsub.f32 1.0, %v550
        %v552 = vmul.f32 %v549, %v551
        %v553 = vadd.f32 %v549, %v552
        %vm554 = vweird.f32 %v548
        %vm555 = vweird.f32 %v549
        %vm556 = vmor %vm554, %vm555
        %v557 = vsel %vm556, %v549, %v553
        %v558 = vand.u32 2147483647, %v548
        %vm559 = vcmp.eq.f32.partialorder %v558, 8.507059e+37
        %v560 = vand.u32 %v548, 2147483648
        %v561 = vor.u32 1.1754944e-38, %v560
        %v562 = vsel %vm559, %v561, %v557
        %v563 = vmul.f32 %v545, %v562
        %v565 = vsel %vm513, %v563, 0
        %567 = vmatpush.msra.mxu0 0.0
        %568 = vmatpush.msra.mxu0 0.0
        %569 = vmatpush.msra.mxu0 0.0
        %570 = vmatpush.msra.mxu0 0.0
        %571 = vmatpush.msra.mxu0 0.0
        %572 = vmatpush.msra.mxu0 0.0
        %573 = vmatpush.msra.mxu0 0.0
        %574 = vmatpush.msra.mxu0 0.0
        %575 = vmatpush.msra.mxu0 0.0
        %576 = vmatpush.msra.mxu0 0.0
        %577 = vmatpush.msra.mxu0 0.0
        %578 = vmatpush.msra.mxu0 0.0
        %579 = vmatpush.msra.mxu0 0.0
        %580 = vmatpush.msra.mxu0 0.0
        %581 = vmatpush.msra.mxu0 0.0
        %582 = vmatpush.msra.mxu0 %v511
        %583 = vmatmul.f32.gmra.mxu0 %v565
        %v584 = vpop.f32.mrf.mxu0
        %v585 = vadd.f32 0.0, %v584
        %586 = vdwg.mxu0
        %v587 = vld [vmem:[%s9] sm:$0xff]
        %s588 = scalar_lea.vmem %s3, 32
        %v589 = vld [vmem:[%s588] sm:$0xff]
        %v590 = vld [vmem:[%s588 + $0x8] sm:$0xff]
        %v591 = vld [vmem:[%s588 + $0x10] sm:$0xff]
        %v592 = vld [vmem:[%s588 + $0x18] sm:$0xff]
        %s593 = scalar_lea.vmem %s6, 1
        %v594 = vld [vmem:[%s593] sm:$0x1]
        %v596 = vperm.slane %v594, 0
        %598 = vmatpush.msra.mxu0 0.0
        %599 = vmatpush.msra.mxu0 0.0
        %600 = vmatpush.msra.mxu0 0.0
        %601 = vmatpush.msra.mxu0 0.0
        %602 = vmatpush.msra.mxu0 0.0
        %603 = vmatpush.msra.mxu0 0.0
        %604 = vmatpush.msra.mxu0 0.0
        %605 = vmatpush.msra.mxu0 0.0
        %606 = vmatpush.msra.mxu0 0.0
        %607 = vmatpush.msra.mxu0 0.0
        %608 = vmatpush.msra.mxu0 0.0
        %609 = vmatpush.msra.mxu0 0.0
        %610 = vmatpush.msra.mxu0 %v592
        %611 = vmatpush.msra.mxu0 %v591
        %612 = vmatpush.msra.mxu0 %v590
        %613 = vmatpush.msra.mxu0 %v589
        %614 = vmatmul.f32.gmra.mxu0 %v429
        %v615 = vpop.f32.mrf.mxu0
        %v616 = vadd.f32 %v596, %v615
        %617 = vdwg.mxu0
        %s618 = scalar_lea.vmem %s4, 32
        %v619 = vld [vmem:[%s618] sm:$0xff]
        %v620 = vld [vmem:[%s618 + $0x8] sm:$0xff]
        %v621 = vld [vmem:[%s618 + $0x10] sm:$0xff]
        %v622 = vld [vmem:[%s618 + $0x18] sm:$0xff]
        %s623 = scalar_lea.vmem %s7, 1
        %v624 = vld [vmem:[%s623] sm:$0x1]
        %v626 = vperm.slane %v624, 0
        %628 = vmatpush.msra.mxu0 0.0
        %629 = vmatpush.msra.mxu0 0.0
        %630 = vmatpush.msra.mxu0 0.0
        %631 = vmatpush.msra.mxu0 0.0
        %632 = vmatpush.msra.mxu0 0.0
        %633 = vmatpush.msra.mxu0 0.0
        %634 = vmatpush.msra.mxu0 0.0
        %635 = vmatpush.msra.mxu0 0.0
        %636 = vmatpush.msra.mxu0 0.0
        %637 = vmatpush.msra.mxu0 0.0
        %638 = vmatpush.msra.mxu0 0.0
        %639 = vmatpush.msra.mxu0 0.0
        %640 = vmatpush.msra.mxu0 %v622
        %641 = vmatpush.msra.mxu0 %v621
        %642 = vmatpush.msra.mxu0 %v620
        %643 = vmatpush.msra.mxu0 %v619
        %644 = vmatmul.f32.gmra.mxu0 %v460
        %v645 = vpop.f32.mrf.mxu0
        %v646 = vadd.f32 %v626, %v645
        %647 = vdwg.mxu0
        %s648 = scalar_lea.vmem %s5, 32
        %v649 = vld [vmem:[%s648] sm:$0xff]
        %v650 = vld [vmem:[%s648 + $0x8] sm:$0xff]
        %v651 = vld [vmem:[%s648 + $0x10] sm:$0xff]
        %v652 = vld [vmem:[%s648 + $0x18] sm:$0xff]
        %s653 = scalar_lea.vmem %s8, 1
        %v654 = vld [vmem:[%s653] sm:$0x1]
        %v656 = vperm.slane %v654, 0
        %658 = vmatpush.msra.mxu0 0.0
        %659 = vmatpush.msra.mxu0 0.0
        %660 = vmatpush.msra.mxu0 0.0
        %661 = vmatpush.msra.mxu0 0.0
        %662 = vmatpush.msra.mxu0 0.0
        %663 = vmatpush.msra.mxu0 0.0
        %664 = vmatpush.msra.mxu0 0.0
        %665 = vmatpush.msra.mxu0 0.0
        %666 = vmatpush.msra.mxu0 0.0
        %667 = vmatpush.msra.mxu0 0.0
        %668 = vmatpush.msra.mxu0 0.0
        %669 = vmatpush.msra.mxu0 0.0
        %670 = vmatpush.msra.mxu0 %v652
        %671 = vmatpush.msra.mxu0 %v651
        %672 = vmatpush.msra.mxu0 %v650
        %673 = vmatpush.msra.mxu0 %v649
        %674 = vmatmul.f32.gmra.mxu0 %v491
        %v675 = vpop.f32.mrf.mxu0
        %v676 = vadd.f32 %v656, %v675
        %677 = vdwg.mxu0
        %v679 = vsel %vm513, %v616, 0
        %v682 = vsel %vm513, %v646, 0
        %684 = vmatpush.xpose.msra.mxu0 0.0
        %685 = vmatpush.xpose.msra.mxu0 0.0
        %686 = vmatpush.xpose.msra.mxu0 0.0
        %687 = vmatpush.xpose.msra.mxu0 0.0
        %688 = vmatpush.xpose.msra.mxu0 0.0
        %689 = vmatpush.xpose.msra.mxu0 0.0
        %690 = vmatpush.xpose.msra.mxu0 0.0
        %691 = vmatpush.xpose.msra.mxu0 0.0
        %692 = vmatpush.xpose.msra.mxu0 0.0
        %693 = vmatpush.xpose.msra.mxu0 0.0
        %694 = vmatpush.xpose.msra.mxu0 0.0
        %695 = vmatpush.xpose.msra.mxu0 0.0
        %696 = vmatpush.xpose.msra.mxu0 0.0
        %697 = vmatpush.xpose.msra.mxu0 0.0
        %698 = vmatpush.xpose.msra.mxu0 0.0
        %699 = vmatpush.xpose.msra.mxu0 %v682
        %700 = vmatmul.f32.gmra.mxu0 %v679
        %v701 = vpop.f32.mrf.mxu0
        %v702 = vadd.f32 0.0, %v701
        %703 = vdwg.mxu0
        %v704 = vsel %vm513, %v702, -inf
        %705 = vmax.xlane.f32.xlu0 %v704
        %v706 = vpop.xlane.xlu0 %705
        %v707 = vsub.f32 %v702, %v706
        %v708 = vmul.f32 %v707, 1.442695
        %v709 = vpow.pop %v708
        %v710 = vsel %vm513, %v709, 0.0
        %711 = vadd.xlane.f32.xlu0 %v710
        %v712 = vpop.xlane.xlu0 %711
        %v713 = vrcp.pop %v712
        %v714 = vmul.f32 %v712, %v713
        %v715 = vsub.f32 1.0, %v714
        %v716 = vmul.f32 %v713, %v715
        %v717 = vadd.f32 %v713, %v716
        %vm718 = vweird.f32 %v712
        %vm719 = vweird.f32 %v713
        %vm720 = vmor %vm718, %vm719
        %v721 = vsel %vm720, %v713, %v717
        %v722 = vand.u32 2147483647, %v712
        %vm723 = vcmp.eq.f32.partialorder %v722, 8.507059e+37
        %v724 = vand.u32 %v712, 2147483648
        %v725 = vor.u32 1.1754944e-38, %v724
        %v726 = vsel %vm723, %v725, %v721
        %v727 = vmul.f32 %v709, %v726
        %v729 = vsel %vm513, %v727, 0
        %731 = vmatpush.msra.mxu0 0.0
        %732 = vmatpush.msra.mxu0 0.0
        %733 = vmatpush.msra.mxu0 0.0
        %734 = vmatpush.msra.mxu0 0.0
        %735 = vmatpush.msra.mxu0 0.0
        %736 = vmatpush.msra.mxu0 0.0
        %737 = vmatpush.msra.mxu0 0.0
        %738 = vmatpush.msra.mxu0 0.0
        %739 = vmatpush.msra.mxu0 0.0
        %740 = vmatpush.msra.mxu0 0.0
        %741 = vmatpush.msra.mxu0 0.0
        %742 = vmatpush.msra.mxu0 0.0
        %743 = vmatpush.msra.mxu0 0.0
        %744 = vmatpush.msra.mxu0 0.0
        %745 = vmatpush.msra.mxu0 0.0
        %746 = vmatpush.msra.mxu0 %v676
        %747 = vmatmul.f32.gmra.mxu0 %v729
        %v748 = vpop.f32.mrf.mxu0
        %v749 = vadd.f32 0.0, %v748
        %750 = vdwg.mxu0
        %s751 = scalar_lea.vmem %s9, 8
        %v752 = vld [vmem:[%s751] sm:$0xff]
        %v754 = vsel %vm513, %v749, 0
        %756 = vmatpush.msra.mxu0 0.0
        %757 = vmatpush.msra.mxu0 0.0
        %758 = vmatpush.msra.mxu0 0.0
        %759 = vmatpush.msra.mxu0 0.0
        %760 = vmatpush.msra.mxu0 0.0
        %761 = vmatpush.msra.mxu0 0.0
        %762 = vmatpush.msra.mxu0 0.0
        %763 = vmatpush.msra.mxu0 0.0
        %764 = vmatpush.msra.mxu0 0.0
        %765 = vmatpush.msra.mxu0 0.0
        %766 = vmatpush.msra.mxu0 0.0
        %767 = vmatpush.msra.mxu0 0.0
        %768 = vmatpush.msra.mxu0 0.0
        %769 = vmatpush.msra.mxu0 0.0
        %770 = vmatpush.msra.mxu0 0.0
        %771 = vmatpush.msra.mxu0 %v752
        %772 = vmatmul.f32.gmra.mxu0 %v754
        %v773 = vpop.f32.mrf.mxu0
        %v774 = vadd.f32 0.0, %v773
        %775 = vdwg.mxu0
        %v777 = vsel %vm513, %v585, 0
        %779 = vmatpush.msra.mxu0 0.0
        %780 = vmatpush.msra.mxu0 0.0
        %781 = vmatpush.msra.mxu0 0.0
        %782 = vmatpush.msra.mxu0 0.0
        %783 = vmatpush.msra.mxu0 0.0
        %784 = vmatpush.msra.mxu0 0.0
        %785 = vmatpush.msra.mxu0 0.0
        %786 = vmatpush.msra.mxu0 0.0
        %787 = vmatpush.msra.mxu0 0.0
        %788 = vmatpush.msra.mxu0 0.0
        %789 = vmatpush.msra.mxu0 0.0
        %790 = vmatpush.msra.mxu0 0.0
        %791 = vmatpush.msra.mxu0 0.0
        %792 = vmatpush.msra.mxu0 0.0
        %793 = vmatpush.msra.mxu0 0.0
        %794 = vmatpush.msra.mxu0 %v587
        %795 = vmatmul.f32.gmra.mxu0 %v777
        %v796 = vpop.f32.mrf.mxu0
        %v797 = vadd.f32 %v774, %v796
        %798 = vdwg.mxu0
        %s799 = scalar_lea.vmem %s3, 64
        %v800 = vld [vmem:[%s799] sm:$0xff]
        %v801 = vld [vmem:[%s799 + $0x8] sm:$0xff]
        %v802 = vld [vmem:[%s799 + $0x10] sm:$0xff]
        %v803 = vld [vmem:[%s799 + $0x18] sm:$0xff]
        %s804 = scalar_lea.vmem %s6, 2
        %v805 = vld [vmem:[%s804] sm:$0x1]
        %v807 = vperm.slane %v805, 0
        %809 = vmatpush.msra.mxu0 0.0
        %810 = vmatpush.msra.mxu0 0.0
        %811 = vmatpush.msra.mxu0 0.0
        %812 = vmatpush.msra.mxu0 0.0
        %813 = vmatpush.msra.mxu0 0.0
        %814 = vmatpush.msra.mxu0 0.0
        %815 = vmatpush.msra.mxu0 0.0
        %816 = vmatpush.msra.mxu0 0.0
        %817 = vmatpush.msra.mxu0 0.0
        %818 = vmatpush.msra.mxu0 0.0
        %819 = vmatpush.msra.mxu0 0.0
        %820 = vmatpush.msra.mxu0 0.0
        %821 = vmatpush.msra.mxu0 %v803
        %822 = vmatpush.msra.mxu0 %v802
        %823 = vmatpush.msra.mxu0 %v801
        %824 = vmatpush.msra.mxu0 %v800
        %825 = vmatmul.f32.gmra.mxu0 %v429
        %v826 = vpop.f32.mrf.mxu0
        %v827 = vadd.f32 %v807, %v826
        %828 = vdwg.mxu0
        %s829 = scalar_lea.vmem %s4, 64
        %v830 = vld [vmem:[%s829] sm:$0xff]
        %v831 = vld [vmem:[%s829 + $0x8] sm:$0xff]
        %v832 = vld [vmem:[%s829 + $0x10] sm:$0xff]
        %v833 = vld [vmem:[%s829 + $0x18] sm:$0xff]
        %s834 = scalar_lea.vmem %s7, 2
        %v835 = vld [vmem:[%s834] sm:$0x1]
        %v837 = vperm.slane %v835, 0
        %839 = vmatpush.msra.mxu0 0.0
        %840 = vmatpush.msra.mxu0 0.0
        %841 = vmatpush.msra.mxu0 0.0
        %842 = vmatpush.msra.mxu0 0.0
        %843 = vmatpush.msra.mxu0 0.0
        %844 = vmatpush.msra.mxu0 0.0
        %845 = vmatpush.msra.mxu0 0.0
        %846 = vmatpush.msra.mxu0 0.0
        %847 = vmatpush.msra.mxu0 0.0
        %848 = vmatpush.msra.mxu0 0.0
        %849 = vmatpush.msra.mxu0 0.0
        %850 = vmatpush.msra.mxu0 0.0
        %851 = vmatpush.msra.mxu0 %v833
        %852 = vmatpush.msra.mxu0 %v832
        %853 = vmatpush.msra.mxu0 %v831
        %854 = vmatpush.msra.mxu0 %v830
        %855 = vmatmul.f32.gmra.mxu0 %v460
        %v856 = vpop.f32.mrf.mxu0
        %v857 = vadd.f32 %v837, %v856
        %858 = vdwg.mxu0
        %s859 = scalar_lea.vmem %s5, 64
        %v860 = vld [vmem:[%s859] sm:$0xff]
        %v861 = vld [vmem:[%s859 + $0x8] sm:$0xff]
        %v862 = vld [vmem:[%s859 + $0x10] sm:$0xff]
        %v863 = vld [vmem:[%s859 + $0x18] sm:$0xff]
        %s864 = scalar_lea.vmem %s8, 2
        %v865 = vld [vmem:[%s864] sm:$0x1]
        %v867 = vperm.slane %v865, 0
        %869 = vmatpush.msra.mxu0 0.0
        %870 = vmatpush.msra.mxu0 0.0
        %871 = vmatpush.msra.mxu0 0.0
        %872 = vmatpush.msra.mxu0 0.0
        %873 = vmatpush.msra.mxu0 0.0
        %874 = vmatpush.msra.mxu0 0.0
        %875 = vmatpush.msra.mxu0 0.0
        %876 = vmatpush.msra.mxu0 0.0
        %877 = vmatpush.msra.mxu0 0.0
        %878 = vmatpush.msra.mxu0 0.0
        %879 = vmatpush.msra.mxu0 0.0
        %880 = vmatpush.msra.mxu0 0.0
        %881 = vmatpush.msra.mxu0 %v863
        %882 = vmatpush.msra.mxu0 %v862
        %883 = vmatpush.msra.mxu0 %v861
        %884 = vmatpush.msra.mxu0 %v860
        %885 = vmatmul.f32.gmra.mxu0 %v491
        %v886 = vpop.f32.mrf.mxu0
        %v887 = vadd.f32 %v867, %v886
        %888 = vdwg.mxu0
        %v890 = vsel %vm513, %v827, 0
        %v893 = vsel %vm513, %v857, 0
        %895 = vmatpush.xpose.msra.mxu0 0.0
        %896 = vmatpush.xpose.msra.mxu0 0.0
        %897 = vmatpush.xpose.msra.mxu0 0.0
        %898 = vmatpush.xpose.msra.mxu0 0.0
        %899 = vmatpush.xpose.msra.mxu0 0.0
        %900 = vmatpush.xpose.msra.mxu0 0.0
        %901 = vmatpush.xpose.msra.mxu0 0.0
        %902 = vmatpush.xpose.msra.mxu0 0.0
        %903 = vmatpush.xpose.msra.mxu0 0.0
        %904 = vmatpush.xpose.msra.mxu0 0.0
        %905 = vmatpush.xpose.msra.mxu0 0.0
        %906 = vmatpush.xpose.msra.mxu0 0.0
        %907 = vmatpush.xpose.msra.mxu0 0.0
        %908 = vmatpush.xpose.msra.mxu0 0.0
        %909 = vmatpush.xpose.msra.mxu0 0.0
        %910 = vmatpush.xpose.msra.mxu0 %v893
        %911 = vmatmul.f32.gmra.mxu0 %v890
        %v912 = vpop.f32.mrf.mxu0
        %v913 = vadd.f32 0.0, %v912
        %914 = vdwg.mxu0
        %v915 = vsel %vm513, %v913, -inf
        %916 = vmax.xlane.f32.xlu0 %v915
        %v917 = vpop.xlane.xlu0 %916
        %v918 = vsub.f32 %v913, %v917
        %v919 = vmul.f32 %v918, 1.442695
        %v920 = vpow.pop %v919
        %v921 = vsel %vm513, %v920, 0.0
        %922 = vadd.xlane.f32.xlu0 %v921
        %v923 = vpop.xlane.xlu0 %922
        %v924 = vrcp.pop %v923
        %v925 = vmul.f32 %v923, %v924
        %v926 = vsub.f32 1.0, %v925
        %v927 = vmul.f32 %v924, %v926
        %v928 = vadd.f32 %v924, %v927
        %vm929 = vweird.f32 %v923
        %vm930 = vweird.f32 %v924
        %vm931 = vmor %vm929, %vm930
        %v932 = vsel %vm931, %v924, %v928
        %v933 = vand.u32 2147483647, %v923
        %vm934 = vcmp.eq.f32.partialorder %v933, 8.507059e+37
        %v935 = vand.u32 %v923, 2147483648
        %v936 = vor.u32 1.1754944e-38, %v935
        %v937 = vsel %vm934, %v936, %v932
        %v938 = vmul.f32 %v920, %v937
        %v940 = vsel %vm513, %v938, 0
        %942 = vmatpush.msra.mxu0 0.0
        %943 = vmatpush.msra.mxu0 0.0
        %944 = vmatpush.msra.mxu0 0.0
        %945 = vmatpush.msra.mxu0 0.0
        %946 = vmatpush.msra.mxu0 0.0
        %947 = vmatpush.msra.mxu0 0.0
        %948 = vmatpush.msra.mxu0 0.0
        %949 = vmatpush.msra.mxu0 0.0
        %950 = vmatpush.msra.mxu0 0.0
        %951 = vmatpush.msra.mxu0 0.0
        %952 = vmatpush.msra.mxu0 0.0
        %953 = vmatpush.msra.mxu0 0.0
        %954 = vmatpush.msra.mxu0 0.0
        %955 = vmatpush.msra.mxu0 0.0
        %956 = vmatpush.msra.mxu0 0.0
        %957 = vmatpush.msra.mxu0 %v887
        %958 = vmatmul.f32.gmra.mxu0 %v940
        %v959 = vpop.f32.mrf.mxu0
        %v960 = vadd.f32 0.0, %v959
        %961 = vdwg.mxu0
        %s962 = scalar_lea.vmem %s9, 16
        %v963 = vld [vmem:[%s962] sm:$0xff]
        %v965 = vsel %vm513, %v960, 0
        %967 = vmatpush.msra.mxu0 0.0
        %968 = vmatpush.msra.mxu0 0.0
        %969 = vmatpush.msra.mxu0 0.0
        %970 = vmatpush.msra.mxu0 0.0
        %971 = vmatpush.msra.mxu0 0.0
        %972 = vmatpush.msra.mxu0 0.0
        %973 = vmatpush.msra.mxu0 0.0
        %974 = vmatpush.msra.mxu0 0.0
        %975 = vmatpush.msra.mxu0 0.0
        %976 = vmatpush.msra.mxu0 0.0
        %977 = vmatpush.msra.mxu0 0.0
        %978 = vmatpush.msra.mxu0 0.0
        %979 = vmatpush.msra.mxu0 0.0
        %980 = vmatpush.msra.mxu0 0.0
        %981 = vmatpush.msra.mxu0 0.0
        %982 = vmatpush.msra.mxu0 %v963
        %983 = vmatmul.f32.gmra.mxu0 %v965
        %v984 = vpop.f32.mrf.mxu0
        %v985 = vadd.f32 0.0, %v984
        %986 = vdwg.mxu0
        %v987 = vadd.f32 %v797, %v985
        %s988 = scalar_lea.vmem %s3, 96
        %v989 = vld [vmem:[%s988] sm:$0xff]
        %v990 = vld [vmem:[%s988 + $0x8] sm:$0xff]
        %v991 = vld [vmem:[%s988 + $0x10] sm:$0xff]
        %v992 = vld [vmem:[%s988 + $0x18] sm:$0xff]
        %s993 = scalar_lea.vmem %s6, 3
        %v994 = vld [vmem:[%s993] sm:$0x1]
        %v996 = vperm.slane %v994, 0
        %998 = vmatpush.msra.mxu0 0.0
        %999 = vmatpush.msra.mxu0 0.0
        %1000 = vmatpush.msra.mxu0 0.0
        %1001 = vmatpush.msra.mxu0 0.0
        %1002 = vmatpush.msra.mxu0 0.0
        %1003 = vmatpush.msra.mxu0 0.0
        %1004 = vmatpush.msra.mxu0 0.0
        %1005 = vmatpush.msra.mxu0 0.0
        %1006 = vmatpush.msra.mxu0 0.0
        %1007 = vmatpush.msra.mxu0 0.0
        %1008 = vmatpush.msra.mxu0 0.0
        %1009 = vmatpush.msra.mxu0 0.0
        %1010 = vmatpush.msra.mxu0 %v992
        %1011 = vmatpush.msra.mxu0 %v991
        %1012 = vmatpush.msra.mxu0 %v990
        %1013 = vmatpush.msra.mxu0 %v989
        %1014 = vmatmul.f32.gmra.mxu0 %v429
        %v1015 = vpop.f32.mrf.mxu0
        %v1016 = vadd.f32 %v996, %v1015
        %1017 = vdwg.mxu0
        %s1018 = scalar_lea.vmem %s4, 96
        %v1019 = vld [vmem:[%s1018] sm:$0xff]
        %v1020 = vld [vmem:[%s1018 + $0x8] sm:$0xff]
        %v1021 = vld [vmem:[%s1018 + $0x10] sm:$0xff]
        %v1022 = vld [vmem:[%s1018 + $0x18] sm:$0xff]
        %s1023 = scalar_lea.vmem %s7, 3
        %v1024 = vld [vmem:[%s1023] sm:$0x1]
        %v1026 = vperm.slane %v1024, 0
        %1028 = vmatpush.msra.mxu0 0.0
        %1029 = vmatpush.msra.mxu0 0.0
        %1030 = vmatpush.msra.mxu0 0.0
        %1031 = vmatpush.msra.mxu0 0.0
        %1032 = vmatpush.msra.mxu0 0.0
        %1033 = vmatpush.msra.mxu0 0.0
        %1034 = vmatpush.msra.mxu0 0.0
        %1035 = vmatpush.msra.mxu0 0.0
        %1036 = vmatpush.msra.mxu0 0.0
        %1037 = vmatpush.msra.mxu0 0.0
        %1038 = vmatpush.msra.mxu0 0.0
        %1039 = vmatpush.msra.mxu0 0.0
        %1040 = vmatpush.msra.mxu0 %v1022
        %1041 = vmatpush.msra.mxu0 %v1021
        %1042 = vmatpush.msra.mxu0 %v1020
        %1043 = vmatpush.msra.mxu0 %v1019
        %1044 = vmatmul.f32.gmra.mxu0 %v460
        %v1045 = vpop.f32.mrf.mxu0
        %v1046 = vadd.f32 %v1026, %v1045
        %1047 = vdwg.mxu0
        %s1048 = scalar_lea.vmem %s5, 96
        %v1049 = vld [vmem:[%s1048] sm:$0xff]
        %v1050 = vld [vmem:[%s1048 + $0x8] sm:$0xff]
        %v1051 = vld [vmem:[%s1048 + $0x10] sm:$0xff]
        %v1052 = vld [vmem:[%s1048 + $0x18] sm:$0xff]
        %s1053 = scalar_lea.vmem %s8, 3
        %v1054 = vld [vmem:[%s1053] sm:$0x1]
        %v1056 = vperm.slane %v1054, 0
        %1058 = vmatpush.msra.mxu0 0.0
        %1059 = vmatpush.msra.mxu0 0.0
        %1060 = vmatpush.msra.mxu0 0.0
        %1061 = vmatpush.msra.mxu0 0.0
        %1062 = vmatpush.msra.mxu0 0.0
        %1063 = vmatpush.msra.mxu0 0.0
        %1064 = vmatpush.msra.mxu0 0.0
        %1065 = vmatpush.msra.mxu0 0.0
        %1066 = vmatpush.msra.mxu0 0.0
        %1067 = vmatpush.msra.mxu0 0.0
        %1068 = vmatpush.msra.mxu0 0.0
        %1069 = vmatpush.msra.mxu0 0.0
        %1070 = vmatpush.msra.mxu0 %v1052
        %1071 = vmatpush.msra.mxu0 %v1051
        %1072 = vmatpush.msra.mxu0 %v1050
        %1073 = vmatpush.msra.mxu0 %v1049
        %1074 = vmatmul.f32.gmra.mxu0 %v491
        %v1075 = vpop.f32.mrf.mxu0
        %v1076 = vadd.f32 %v1056, %v1075
        %1077 = vdwg.mxu0
        %v1079 = vsel %vm513, %v1016, 0
        %v1082 = vsel %vm513, %v1046, 0
        %1084 = vmatpush.xpose.msra.mxu0 0.0
        %1085 = vmatpush.xpose.msra.mxu0 0.0
        %1086 = vmatpush.xpose.msra.mxu0 0.0
        %1087 = vmatpush.xpose.msra.mxu0 0.0
        %1088 = vmatpush.xpose.msra.mxu0 0.0
        %1089 = vmatpush.xpose.msra.mxu0 0.0
        %1090 = vmatpush.xpose.msra.mxu0 0.0
        %1091 = vmatpush.xpose.msra.mxu0 0.0
        %1092 = vmatpush.xpose.msra.mxu0 0.0
        %1093 = vmatpush.xpose.msra.mxu0 0.0
        %1094 = vmatpush.xpose.msra.mxu0 0.0
        %1095 = vmatpush.xpose.msra.mxu0 0.0
        %1096 = vmatpush.xpose.msra.mxu0 0.0
        %1097 = vmatpush.xpose.msra.mxu0 0.0
        %1098 = vmatpush.xpose.msra.mxu0 0.0
        %1099 = vmatpush.xpose.msra.mxu0 %v1082
        %1100 = vmatmul.f32.gmra.mxu0 %v1079
        %v1101 = vpop.f32.mrf.mxu0
        %v1102 = vadd.f32 0.0, %v1101
        %1103 = vdwg.mxu0
        %v1104 = vsel %vm513, %v1102, -inf
        %1105 = vmax.xlane.f32.xlu0 %v1104
        %v1106 = vpop.xlane.xlu0 %1105
        %v1107 = vsub.f32 %v1102, %v1106
        %v1108 = vmul.f32 %v1107, 1.442695
        %v1109 = vpow.pop %v1108
        %v1110 = vsel %vm513, %v1109, 0.0
        %1111 = vadd.xlane.f32.xlu0 %v1110
        %v1112 = vpop.xlane.xlu0 %1111
        %v1113 = vrcp.pop %v1112
        %v1114 = vmul.f32 %v1112, %v1113
        %v1115 = vsub.f32 1.0, %v1114
        %v1116 = vmul.f32 %v1113, %v1115
        %v1117 = vadd.f32 %v1113, %v1116
        %vm1118 = vweird.f32 %v1112
        %vm1119 = vweird.f32 %v1113
        %vm1120 = vmor %vm1118, %vm1119
        %v1121 = vsel %vm1120, %v1113, %v1117
        %v1122 = vand.u32 2147483647, %v1112
        %vm1123 = vcmp.eq.f32.partialorder %v1122, 8.507059e+37
        %v1124 = vand.u32 %v1112, 2147483648
        %v1125 = vor.u32 1.1754944e-38, %v1124
        %v1126 = vsel %vm1123, %v1125, %v1121
        %v1127 = vmul.f32 %v1109, %v1126
        %v1129 = vsel %vm513, %v1127, 0
        %1131 = vmatpush.msra.mxu0 0.0
        %1132 = vmatpush.msra.mxu0 0.0
        %1133 = vmatpush.msra.mxu0 0.0
        %1134 = vmatpush.msra.mxu0 0.0
        %1135 = vmatpush.msra.mxu0 0.0
        %1136 = vmatpush.msra.mxu0 0.0
        %1137 = vmatpush.msra.mxu0 0.0
        %1138 = vmatpush.msra.mxu0 0.0
        %1139 = vmatpush.msra.mxu0 0.0
        %1140 = vmatpush.msra.mxu0 0.0
        %1141 = vmatpush.msra.mxu0 0.0
        %1142 = vmatpush.msra.mxu0 0.0
        %1143 = vmatpush.msra.mxu0 0.0
        %1144 = vmatpush.msra.mxu0 0.0
        %1145 = vmatpush.msra.mxu0 0.0
        %1146 = vmatpush.msra.mxu0 %v1076
        %1147 = vmatmul.f32.gmra.mxu0 %v1129
        %v1148 = vpop.f32.mrf.mxu0
        %v1149 = vadd.f32 0.0, %v1148
        %1150 = vdwg.mxu0
        %s1151 = scalar_lea.vmem %s9, 24
        %v1152 = vld [vmem:[%s1151] sm:$0xff]
        %v1154 = vsel %vm513, %v1149, 0
        %1156 = vmatpush.msra.mxu0 0.0
        %1157 = vmatpush.msra.mxu0 0.0
        %1158 = vmatpush.msra.mxu0 0.0
        %1159 = vmatpush.msra.mxu0 0.0
        %1160 = vmatpush.msra.mxu0 0.0
        %1161 = vmatpush.msra.mxu0 0.0
        %1162 = vmatpush.msra.mxu0 0.0
        %1163 = vmatpush.msra.mxu0 0.0
        %1164 = vmatpush.msra.mxu0 0.0
        %1165 = vmatpush.msra.mxu0 0.0
        %1166 = vmatpush.msra.mxu0 0.0
        %1167 = vmatpush.msra.mxu0 0.0
        %1168 = vmatpush.msra.mxu0 0.0
        %1169 = vmatpush.msra.mxu0 0.0
        %1170 = vmatpush.msra.mxu0 0.0
        %1171 = vmatpush.msra.mxu0 %v1152
        %1172 = vmatmul.f32.gmra.mxu0 %v1154
        %v1173 = vpop.f32.mrf.mxu0
        %v1174 = vadd.f32 0.0, %v1173
        %1175 = vdwg.mxu0
        %v1176 = vadd.f32 %v987, %v1174
        %v1177 = vld [vmem:[%s10] sm:$0x1]
        %v1179 = vperm.slane %v1177, 0
        %v1181 = vadd.f32 %v1176, %v1179
        %1182 = vst.msk [vmem:[%s403] sm:$0xff] %vm427, %v1181
        %s1183 = sand.u32 %s279, 1
        %s1184 = scalar_lea.sflag [#allocation3], %s1183
        %s1185 = sand.u32 %s279, 1
        %s1186 = smul.addr %s1185, 8
        %s1187 = scalar_lea.vmem [#allocation2], %s1186
        // Predicated region
        $region65: #{multi_head_attention.1} parent=63 // pred_check
          %p1188 = pneg %p289
        $region66: #{multi_head_attention.1} parent=63 // pred_check_branch
          %1190 = sbr.rel (%p1188) target = $region68
        $region67: #{multi_head_attention.1} parent=63 // pred_region
          %1192 = vsyncadd %s1184, 0
          %s1193 = smul.addr %s25, 8
          %s1194 = scalar_lea.hbm %s11, %s1193
          %s1196 = sshll.u32 %s1187, 4
          %s1197 = int_to_ptr.vmem [resolvable:$true] %s1196
          %s1198 = sshll.u32 %s1194, 4
          %s1199 = int_to_ptr.hbm [resolvable:$true] %s1198
          %1201 = dma.vmem_to_hbm [thread:$0]  %s1197, 128, %s1199, %s1184
        $region68: #{multi_head_attention.1} parent=63 // pred_fallthru
          _
      $region64: #{multi_head_attention.1} parent=5 // pred_fallthru
        _
      %p1202 = scmp.le.s32.totalorder 2, %s20
      // Predicated region
      $region69: #{multi_head_attention.1} parent=5 // pred_check
        %p1203 = pneg %p1202
      $region70: #{multi_head_attention.1} parent=5 // pred_check_branch
        %1205 = sbr.rel (%p1203) target = $region72
      $region71: #{multi_head_attention.1} parent=5 // pred_region
        %s1206 = ssub.s32 %s20, 2
        // Predicated region
        $region73: #{multi_head_attention.1} parent=71 // pred_check
          %p1207 = pneg %p295
        $region74: #{multi_head_attention.1} parent=71 // pred_check_branch
          %1209 = sbr.rel (%p1207) target = $region76
        $region75: #{multi_head_attention.1} parent=71 // pred_region
          %s1210 = sand.u32 %s280, 1
          %s1211 = scalar_lea.sflag [#allocation3], %s1210
          %s1212 = sand.u32 %s280, 1
          %s1213 = smul.addr %s1212, 8
          %s1214 = scalar_lea.vmem [#allocation2], %s1213
          %1216 = dma.done %s1211, 128
        $region76: #{multi_head_attention.1} parent=71 // pred_fallthru
          _
      $region72: #{multi_head_attention.1} parent=5 // pred_fallthru
        _
    $region6: #{multi_head_attention.1} parent=1 // loop_footer
      %s24 = sadd.s32 1, %s20
    $region7: #{multi_head_attention.1} parent=1 // loop_footer_branch
      %19 = sbr.rel target = $region3
    $region8: #{multi_head_attention.1} parent=1 // loop_exit
      _
    %1217 = vsyncpa [#allocation3], 1
    %s1218 = scalar_lea.sflag [#allocation3], 1
    %1219 = vsyncpa %s1218, 1

</llo_original>
